<compile_context>
chip_gen: v7x
topology: tpu7x:2x2x1
jax: 0.10.0
libtpu: 0.0.40
codegen_flags: <defaults>
</compile_context>

<pallas_src>
import jax
import jax.numpy as jnp
from jax.experimental import pallas as pl
from jax.experimental.pallas import tpu as pltpu

# ---------------- model dims (small, consistent with the module) -------------
B = 2            # batch
L = 16           # sequence length (token positions)
V = 32           # vocab_size
E = 16           # embedding_dim
H = 32           # hidden_dim (conv out channels, LSTM input size)
O = 32           # output_dim (LSTM hidden size)
C = 8            # num_classes
KCONV = 3        # conv kernel size
LC = L - KCONV + 1   # length after valid conv = 14
T = LC // 2          # length after maxpool(k=2, s=2) = 7
G4 = 4 * O           # fused gate width = 128 (one full vreg of lanes)

# weight-slab row offsets: [lut (V) | W_ih (H) | W_hh (O) | fc_w (O)] = 128 rows
_R_LUT = 0
_R_WIH = V
_R_WHH = V + H
_R_FCW = V + H + O


def cnn_lstm_kernel(tok_ref, w_ref, b_ref, out_ref):
    # ---- embedding folded into conv: one-hot @ lut (lut = emb @ conv_w_k, all k) ----
    tok = tok_ref[...]                                                # (B*L, 1) int32
    vocab_iota = jax.lax.broadcasted_iota(jnp.int32, (B * L, V), 1)
    onehot = (tok == vocab_iota).astype(jnp.float32)                  # (B*L, V)
    proj = jnp.dot(onehot, w_ref[_R_LUT:_R_LUT + V, :],
                   preferred_element_type=jnp.float32)                # (B*L, 128)
    proj = proj[:, 0:KCONV * H].reshape(B, L, KCONV * H)              # (B, L, 96)

    # ---- Conv1d (valid, k=3) = shifted adds of the pre-projected blocks ----
    conv = (proj[:, 0:LC,      0 * H:1 * H]
            + proj[:, 1:1 + LC, 1 * H:2 * H]
            + proj[:, 2:2 + LC, 2 * H:3 * H]
            + b_ref[0:1, 0:H])                                        # (B, LC, H)
    # ---- ReLU ----
    conv = jnp.maximum(conv, 0.0)
    # ---- MaxPool1d(kernel=2, stride=2) on flattened rows ----
    pooled = jnp.max(conv.reshape(B * T, 2, H), axis=1)               # (B*T, H)
    # time-major for the recurrence: row t*B + b
    pooled_tm = pooled.reshape(B, T, H).transpose(1, 0, 2).reshape(T * B, H)
    # TODO(synk): Dropout(0.5) implemented with eval-mode semantics (identity).

    # ---- LSTM: input projection hoisted out of the recurrence, time-major ----
    # W_ih/W_hh/bias have their g-gate block pre-scaled x2 (tanh via 2*sigmoid-1).
    xp = (jnp.dot(pooled_tm, w_ref[_R_WIH:_R_WIH + H, :],
                  preferred_element_type=jnp.float32)
          + b_ref[1:2, :])                                            # (T*B, 128)

    whh = w_ref[_R_WHH:_R_WHH + O, :]                                 # (O, 128)

    h = jnp.zeros((B, O), jnp.float32)
    c = jnp.zeros((B, O), jnp.float32)
    for t in range(T):
        x_t = xp[t * B:(t + 1) * B, :]                                # contiguous rows
        # one recurrent MXU push per step: (B, O) @ (O, 4O)
        gates = x_t + jnp.dot(h, whh, preferred_element_type=jnp.float32)  # (B, 128)
        sig = jax.nn.sigmoid(gates)                                   # single EUP pass
        i_g = sig[:, 0 * O:1 * O]
        f_g = sig[:, 1 * O:2 * O]
        g_g = 2.0 * sig[:, 2 * O:3 * O] - 1.0                         # == tanh(z_g)
        o_g = sig[:, 3 * O:4 * O]
        c = f_g * c + i_g * g_g
        h = o_g * jnp.tanh(c)

    # ---- final Linear on last timestep hidden state (lane-dense, padded cols) ----
    out_ref[...] = (jnp.dot(h, w_ref[_R_FCW:_R_FCW + O, :],
                            preferred_element_type=jnp.float32)
                    + b_ref[2:3, :])                                  # (B, 128)


def prepare_params(p):
    """Run ONCE at weight-load time: fold / fuse / pad everything lane-dense."""
    # embedding folded into conv:  lut[:, k*H:(k+1)*H] = emb @ conv_w[k]
    lut = jnp.concatenate([p["emb"] @ p["conv_w"][k] for k in range(KCONV)],
                          axis=1)                                     # (V, 3H)
    lut = jnp.pad(lut, ((0, 0), (0, G4 - KCONV * H)))                 # (V, 128)
    # LSTM gate fusion (PyTorch order i, f, g, o); g-gate columns pre-scaled x2
    gate_scale = jnp.concatenate([jnp.ones((O,), jnp.float32),
                                  jnp.ones((O,), jnp.float32),
                                  2.0 * jnp.ones((O,), jnp.float32),
                                  jnp.ones((O,), jnp.float32)])       # (4O,)
    wih = jnp.concatenate([p["w_ih"][g] for g in range(4)], axis=1) * gate_scale
    whh = jnp.concatenate([p["w_hh"][g] for g in range(4)], axis=1) * gate_scale
    bl = p["b_lstm"].reshape(1, G4) * gate_scale                      # (1, 128)
    fcw = jnp.pad(p["fc_w"], ((0, 0), (0, G4 - C)))                   # (O, 128)

    wslab = jnp.concatenate([lut, wih, whh, fcw], axis=0)             # (128, 128)
    bias = jnp.zeros((8, G4), jnp.float32)
    bias = bias.at[0, 0:H].set(p["conv_b"][0])
    bias = bias.at[1, :].set(bl[0])
    bias = bias.at[2, 0:C].set(p["fc_b"][0])
    return {"w": wslab, "b": bias}


@jax.jit
def cnn_lstm_forward(tok, fused):
    tok2d = tok.reshape(B * L, 1).astype(jnp.int32)   # layout plumbing, not in-kernel
    vmem = pl.BlockSpec(memory_space=pltpu.MemorySpace.VMEM)
    out = pl.pallas_call(
        cnn_lstm_kernel,
        out_shape=jax.ShapeDtypeStruct((B, G4), jnp.float32),
        in_specs=[vmem, vmem, vmem],
        out_specs=vmem,
    )(tok2d, fused["w"], fused["b"])
    return out[:, :C]


def reference_forward(tok, p):
    """Pure-JAX reference with the original (unfused) math."""
    x = p["emb"][tok]                                                 # (B, L, E)
    conv = sum(jnp.einsum('ble,eh->blh', x[:, k:k + LC, :], p["conv_w"][k])
               for k in range(KCONV)) + p["conv_b"]
    conv = jnp.maximum(conv, 0.0)
    pooled = jnp.max(conv.reshape(B, T, 2, H), axis=2)
    h = jnp.zeros((B, O)); c = jnp.zeros((B, O))
    for t in range(T):
        x_t = pooled[:, t, :]
        g = [x_t @ p["w_ih"][k] + h @ p["w_hh"][k] + p["b_lstm"][k]
             for k in range(4)]
        i_g, f_g = jax.nn.sigmoid(g[0]), jax.nn.sigmoid(g[1])
        g_g, o_g = jnp.tanh(g[2]), jax.nn.sigmoid(g[3])
        c = f_g * c + i_g * g_g
        h = o_g * jnp.tanh(c)
    return h @ p["fc_w"] + p["fc_b"]


def init_params(key):
    ks = jax.random.split(key, 8)
    s = 0.1
    return {
        "emb":    s * jax.random.normal(ks[0], (V, E), jnp.float32),
        "conv_w": s * jax.random.normal(ks[1], (KCONV, E, H), jnp.float32),
        "conv_b": s * jax.random.normal(ks[2], (1, H), jnp.float32),
        # LSTM weights stacked per gate (i, f, g, o); biases = b_ih + b_hh fused.
        "w_ih":   s * jax.random.normal(ks[3], (4, H, O), jnp.float32),
        "w_hh":   s * jax.random.normal(ks[4], (4, O, O), jnp.float32),
        "b_lstm": s * jax.random.normal(ks[5], (4, O), jnp.float32),
        "fc_w":   s * jax.random.normal(ks[6], (O, C), jnp.float32),
        "fc_b":   s * jax.random.normal(ks[7], (1, C), jnp.float32),
    }


if __name__ == "__main__":
    key = jax.random.PRNGKey(0)
    k_tok, k_par = jax.random.split(key)
    tok = jax.random.randint(k_tok, (B, L), 0, V, dtype=jnp.int32)
    params = init_params(k_par)

    # one-time weight folding (NOT part of the per-call forward)
    fused = jax.tree_util.tree_map(jax.block_until_ready, prepare_params(params))

    out = cnn_lstm_forward(tok, fused)
    out = jax.block_until_ready(out)

    ref = reference_forward(tok, params)
    assert out.shape == (B, C)
    assert jnp.allclose(out, ref, atol=1e-4, rtol=1e-4), (out, ref)
    print("KERNEL_OK")
</pallas_src>

<mosaic_0001>
module attributes {stable_mosaic.version = 11 : i64} {
  func.func @cnn_lstm_kernel(%arg0: memref<32x1xi32, #tpu.memory_space<vmem>>, %arg1: memref<128x128xf32, #tpu.memory_space<vmem>>, %arg2: memref<8x128xf32, #tpu.memory_space<vmem>>, %arg3: memref<2x128xf32, #tpu.memory_space<vmem>>) attributes {dimension_semantics = [], scalar_prefetch = 0 : i64, scratch_operands = 0 : i64, tpu.core_type = #tpu.core_type<tc>} {
    %c0 = arith.constant 0 : index
    %c0_0 = arith.constant 0 : index
    %0 = vector.load %arg0[%c0, %c0_0] : memref<32x1xi32, #tpu.memory_space<vmem>>, vector<32x1xi32>
    %1 = tpu.iota {dimensions = array<i32: 1>} : vector<32x32xi32>
    %2 = vector.broadcast %0 : vector<32x1xi32> to vector<32x32xi32>
    %3 = arith.cmpi eq, %2, %1 : vector<32x32xi32>
    %4 = arith.extui %3 : vector<32x32xi1> to vector<32x32xi32>
    %5 = arith.sitofp %4 : vector<32x32xi32> to vector<32x32xf32>
    %c0_1 = arith.constant 0 : index
    %c0_2 = arith.constant 0 : index
    %6 = vector.load %arg1[%c0_1, %c0_2] : memref<128x128xf32, #tpu.memory_space<vmem>>, vector<32x128xf32>
    %cst = arith.constant dense<0.000000e+00> : vector<32x128xf32>
    %7 = tpu.matmul %5, %6, %cst {dimension_numbers = #tpu.dot_dimension_numbers<[1], [0], [0], [1], [0, 0, 1, 1], [], []>} : vector<32x32xf32>, vector<32x128xf32>, vector<32x128xf32> -> vector<32x128xf32>
    %8 = vector.extract_strided_slice %7 {offsets = [0, 0], sizes = [32, 96], strides = [1, 1]} : vector<32x128xf32> to vector<32x96xf32>
    %9 = vector.shape_cast %8 : vector<32x96xf32> to vector<2x16x96xf32>
    %10 = vector.extract_strided_slice %9 {offsets = [0, 0, 0], sizes = [2, 14, 32], strides = [1, 1, 1]} : vector<2x16x96xf32> to vector<2x14x32xf32>
    %11 = vector.extract_strided_slice %9 {offsets = [0, 1, 32], sizes = [2, 14, 32], strides = [1, 1, 1]} : vector<2x16x96xf32> to vector<2x14x32xf32>
    %12 = arith.addf %10, %11 : vector<2x14x32xf32>
    %13 = vector.extract_strided_slice %9 {offsets = [0, 2, 64], sizes = [2, 14, 32], strides = [1, 1, 1]} : vector<2x16x96xf32> to vector<2x14x32xf32>
    %14 = arith.addf %12, %13 : vector<2x14x32xf32>
    %c0_3 = arith.constant 0 : index
    %c0_4 = arith.constant 0 : index
    %15 = vector.load %arg2[%c0_3, %c0_4] : memref<8x128xf32, #tpu.memory_space<vmem>>, vector<1x32xf32>
    %16 = vector.shape_cast %15 : vector<1x32xf32> to vector<1x1x32xf32>
    %17 = vector.broadcast %16 : vector<1x1x32xf32> to vector<2x14x32xf32>
    %18 = arith.addf %14, %17 : vector<2x14x32xf32>
    %cst_5 = arith.constant 0.000000e+00 : f32
    %19 = vector.broadcast %cst_5 : f32 to vector<2x14x32xf32>
    %20 = arith.maximumf %18, %19 : vector<2x14x32xf32>
    %21 = vector.shape_cast %20 : vector<2x14x32xf32> to vector<14x2x32xf32>
    %cst_6 = arith.constant dense<0xFF800000> : vector<14x32xf32>
    %22 = vector.multi_reduction <maximumf>, %21, %cst_6 [1] : vector<14x2x32xf32> to vector<14x32xf32>
    %23 = vector.shape_cast %22 : vector<14x32xf32> to vector<2x7x32xf32>
    %24 = tpu.transpose %23, [1, 0, 2] : vector<2x7x32xf32> -> vector<7x2x32xf32>
    %25 = vector.shape_cast %24 : vector<7x2x32xf32> to vector<14x32xf32>
    %c32 = arith.constant 32 : index
    %c0_7 = arith.constant 0 : index
    %26 = vector.load %arg1[%c32, %c0_7] : memref<128x128xf32, #tpu.memory_space<vmem>>, vector<32x128xf32>
    %cst_8 = arith.constant dense<0.000000e+00> : vector<14x128xf32>
    %27 = tpu.matmul %25, %26, %cst_8 {dimension_numbers = #tpu.dot_dimension_numbers<[1], [0], [0], [1], [0, 0, 1, 1], [], []>} : vector<14x32xf32>, vector<32x128xf32>, vector<14x128xf32> -> vector<14x128xf32>
    %c1 = arith.constant 1 : index
    %c0_9 = arith.constant 0 : index
    %28 = vector.load %arg2[%c1, %c0_9] : memref<8x128xf32, #tpu.memory_space<vmem>>, vector<1x128xf32>
    %29 = vector.broadcast %28 : vector<1x128xf32> to vector<14x128xf32>
    %30 = arith.addf %27, %29 : vector<14x128xf32>
    %c64 = arith.constant 64 : index
    %c0_10 = arith.constant 0 : index
    %31 = vector.load %arg1[%c64, %c0_10] : memref<128x128xf32, #tpu.memory_space<vmem>>, vector<32x128xf32>
    %cst_11 = arith.constant 0.000000e+00 : f32
    %32 = vector.broadcast %cst_11 : f32 to vector<2x32xf32>
    %cst_12 = arith.constant 0.000000e+00 : f32
    %33 = vector.broadcast %cst_12 : f32 to vector<2x32xf32>
    %34 = vector.extract_strided_slice %30 {offsets = [0, 0], sizes = [2, 128], strides = [1, 1]} : vector<14x128xf32> to vector<2x128xf32>
    %cst_13 = arith.constant dense<0.000000e+00> : vector<2x128xf32>
    %35 = tpu.matmul %32, %31, %cst_13 {dimension_numbers = #tpu.dot_dimension_numbers<[1], [0], [0], [1], [0, 0, 1, 1], [], []>} : vector<2x32xf32>, vector<32x128xf32>, vector<2x128xf32> -> vector<2x128xf32>
    %36 = arith.addf %34, %35 : vector<2x128xf32>
    %37 = arith.negf %36 : vector<2x128xf32>
    %38 = math.exp %37 : vector<2x128xf32>
    %cst_14 = arith.constant 1.000000e+00 : f32
    %39 = vector.broadcast %cst_14 : f32 to vector<2x128xf32>
    %40 = arith.addf %39, %38 : vector<2x128xf32>
    %41 = arith.divf %39, %40 : vector<2x128xf32>
    %42 = vector.extract_strided_slice %41 {offsets = [0, 0], sizes = [2, 32], strides = [1, 1]} : vector<2x128xf32> to vector<2x32xf32>
    %43 = vector.extract_strided_slice %41 {offsets = [0, 32], sizes = [2, 32], strides = [1, 1]} : vector<2x128xf32> to vector<2x32xf32>
    %44 = vector.extract_strided_slice %41 {offsets = [0, 64], sizes = [2, 32], strides = [1, 1]} : vector<2x128xf32> to vector<2x32xf32>
    %cst_15 = arith.constant 2.000000e+00 : f32
    %45 = vector.broadcast %cst_15 : f32 to vector<2x32xf32>
    %46 = arith.mulf %45, %44 : vector<2x32xf32>
    %cst_16 = arith.constant 1.000000e+00 : f32
    %47 = vector.broadcast %cst_16 : f32 to vector<2x32xf32>
    %48 = arith.subf %46, %47 : vector<2x32xf32>
    %49 = vector.extract_strided_slice %41 {offsets = [0, 96], sizes = [2, 32], strides = [1, 1]} : vector<2x128xf32> to vector<2x32xf32>
    %50 = arith.mulf %43, %33 : vector<2x32xf32>
    %51 = arith.mulf %42, %48 : vector<2x32xf32>
    %52 = arith.addf %50, %51 : vector<2x32xf32>
    %53 = math.tanh %52 : vector<2x32xf32>
    %54 = arith.mulf %49, %53 : vector<2x32xf32>
    %55 = vector.extract_strided_slice %30 {offsets = [2, 0], sizes = [2, 128], strides = [1, 1]} : vector<14x128xf32> to vector<2x128xf32>
    %cst_17 = arith.constant dense<0.000000e+00> : vector<2x128xf32>
    %56 = tpu.matmul %54, %31, %cst_17 {dimension_numbers = #tpu.dot_dimension_numbers<[1], [0], [0], [1], [0, 0, 1, 1], [], []>} : vector<2x32xf32>, vector<32x128xf32>, vector<2x128xf32> -> vector<2x128xf32>
    %57 = arith.addf %55, %56 : vector<2x128xf32>
    %58 = arith.negf %57 : vector<2x128xf32>
    %59 = math.exp %58 : vector<2x128xf32>
    %cst_18 = arith.constant 1.000000e+00 : f32
    %60 = vector.broadcast %cst_18 : f32 to vector<2x128xf32>
    %61 = arith.addf %60, %59 : vector<2x128xf32>
    %62 = arith.divf %60, %61 : vector<2x128xf32>
    %63 = vector.extract_strided_slice %62 {offsets = [0, 0], sizes = [2, 32], strides = [1, 1]} : vector<2x128xf32> to vector<2x32xf32>
    %64 = vector.extract_strided_slice %62 {offsets = [0, 32], sizes = [2, 32], strides = [1, 1]} : vector<2x128xf32> to vector<2x32xf32>
    %65 = vector.extract_strided_slice %62 {offsets = [0, 64], sizes = [2, 32], strides = [1, 1]} : vector<2x128xf32> to vector<2x32xf32>
    %cst_19 = arith.constant 2.000000e+00 : f32
    %66 = vector.broadcast %cst_19 : f32 to vector<2x32xf32>
    %67 = arith.mulf %66, %65 : vector<2x32xf32>
    %cst_20 = arith.constant 1.000000e+00 : f32
    %68 = vector.broadcast %cst_20 : f32 to vector<2x32xf32>
    %69 = arith.subf %67, %68 : vector<2x32xf32>
    %70 = vector.extract_strided_slice %62 {offsets = [0, 96], sizes = [2, 32], strides = [1, 1]} : vector<2x128xf32> to vector<2x32xf32>
    %71 = arith.mulf %64, %52 : vector<2x32xf32>
    %72 = arith.mulf %63, %69 : vector<2x32xf32>
    %73 = arith.addf %71, %72 : vector<2x32xf32>
    %74 = math.tanh %73 : vector<2x32xf32>
    %75 = arith.mulf %70, %74 : vector<2x32xf32>
    %76 = vector.extract_strided_slice %30 {offsets = [4, 0], sizes = [2, 128], strides = [1, 1]} : vector<14x128xf32> to vector<2x128xf32>
    %cst_21 = arith.constant dense<0.000000e+00> : vector<2x128xf32>
    %77 = tpu.matmul %75, %31, %cst_21 {dimension_numbers = #tpu.dot_dimension_numbers<[1], [0], [0], [1], [0, 0, 1, 1], [], []>} : vector<2x32xf32>, vector<32x128xf32>, vector<2x128xf32> -> vector<2x128xf32>
    %78 = arith.addf %76, %77 : vector<2x128xf32>
    %79 = arith.negf %78 : vector<2x128xf32>
    %80 = math.exp %79 : vector<2x128xf32>
    %cst_22 = arith.constant 1.000000e+00 : f32
    %81 = vector.broadcast %cst_22 : f32 to vector<2x128xf32>
    %82 = arith.addf %81, %80 : vector<2x128xf32>
    %83 = arith.divf %81, %82 : vector<2x128xf32>
    %84 = vector.extract_strided_slice %83 {offsets = [0, 0], sizes = [2, 32], strides = [1, 1]} : vector<2x128xf32> to vector<2x32xf32>
    %85 = vector.extract_strided_slice %83 {offsets = [0, 32], sizes = [2, 32], strides = [1, 1]} : vector<2x128xf32> to vector<2x32xf32>
    %86 = vector.extract_strided_slice %83 {offsets = [0, 64], sizes = [2, 32], strides = [1, 1]} : vector<2x128xf32> to vector<2x32xf32>
    %cst_23 = arith.constant 2.000000e+00 : f32
    %87 = vector.broadcast %cst_23 : f32 to vector<2x32xf32>
    %88 = arith.mulf %87, %86 : vector<2x32xf32>
    %cst_24 = arith.constant 1.000000e+00 : f32
    %89 = vector.broadcast %cst_24 : f32 to vector<2x32xf32>
    %90 = arith.subf %88, %89 : vector<2x32xf32>
    %91 = vector.extract_strided_slice %83 {offsets = [0, 96], sizes = [2, 32], strides = [1, 1]} : vector<2x128xf32> to vector<2x32xf32>
    %92 = arith.mulf %85, %73 : vector<2x32xf32>
    %93 = arith.mulf %84, %90 : vector<2x32xf32>
    %94 = arith.addf %92, %93 : vector<2x32xf32>
    %95 = math.tanh %94 : vector<2x32xf32>
    %96 = arith.mulf %91, %95 : vector<2x32xf32>
    %97 = vector.extract_strided_slice %30 {offsets = [6, 0], sizes = [2, 128], strides = [1, 1]} : vector<14x128xf32> to vector<2x128xf32>
    %cst_25 = arith.constant dense<0.000000e+00> : vector<2x128xf32>
    %98 = tpu.matmul %96, %31, %cst_25 {dimension_numbers = #tpu.dot_dimension_numbers<[1], [0], [0], [1], [0, 0, 1, 1], [], []>} : vector<2x32xf32>, vector<32x128xf32>, vector<2x128xf32> -> vector<2x128xf32>
    %99 = arith.addf %97, %98 : vector<2x128xf32>
    %100 = arith.negf %99 : vector<2x128xf32>
    %101 = math.exp %100 : vector<2x128xf32>
    %cst_26 = arith.constant 1.000000e+00 : f32
    %102 = vector.broadcast %cst_26 : f32 to vector<2x128xf32>
    %103 = arith.addf %102, %101 : vector<2x128xf32>
    %104 = arith.divf %102, %103 : vector<2x128xf32>
    %105 = vector.extract_strided_slice %104 {offsets = [0, 0], sizes = [2, 32], strides = [1, 1]} : vector<2x128xf32> to vector<2x32xf32>
    %106 = vector.extract_strided_slice %104 {offsets = [0, 32], sizes = [2, 32], strides = [1, 1]} : vector<2x128xf32> to vector<2x32xf32>
    %107 = vector.extract_strided_slice %104 {offsets = [0, 64], sizes = [2, 32], strides = [1, 1]} : vector<2x128xf32> to vector<2x32xf32>
    %cst_27 = arith.constant 2.000000e+00 : f32
    %108 = vector.broadcast %cst_27 : f32 to vector<2x32xf32>
    %109 = arith.mulf %108, %107 : vector<2x32xf32>
    %cst_28 = arith.constant 1.000000e+00 : f32
    %110 = vector.broadcast %cst_28 : f32 to vector<2x32xf32>
    %111 = arith.subf %109, %110 : vector<2x32xf32>
    %112 = vector.extract_strided_slice %104 {offsets = [0, 96], sizes = [2, 32], strides = [1, 1]} : vector<2x128xf32> to vector<2x32xf32>
    %113 = arith.mulf %106, %94 : vector<2x32xf32>
    %114 = arith.mulf %105, %111 : vector<2x32xf32>
    %115 = arith.addf %113, %114 : vector<2x32xf32>
    %116 = math.tanh %115 : vector<2x32xf32>
    %117 = arith.mulf %112, %116 : vector<2x32xf32>
    %118 = vector.extract_strided_slice %30 {offsets = [8, 0], sizes = [2, 128], strides = [1, 1]} : vector<14x128xf32> to vector<2x128xf32>
    %cst_29 = arith.constant dense<0.000000e+00> : vector<2x128xf32>
    %119 = tpu.matmul %117, %31, %cst_29 {dimension_numbers = #tpu.dot_dimension_numbers<[1], [0], [0], [1], [0, 0, 1, 1], [], []>} : vector<2x32xf32>, vector<32x128xf32>, vector<2x128xf32> -> vector<2x128xf32>
    %120 = arith.addf %118, %119 : vector<2x128xf32>
    %121 = arith.negf %120 : vector<2x128xf32>
    %122 = math.exp %121 : vector<2x128xf32>
    %cst_30 = arith.constant 1.000000e+00 : f32
    %123 = vector.broadcast %cst_30 : f32 to vector<2x128xf32>
    %124 = arith.addf %123, %122 : vector<2x128xf32>
    %125 = arith.divf %123, %124 : vector<2x128xf32>
    %126 = vector.extract_strided_slice %125 {offsets = [0, 0], sizes = [2, 32], strides = [1, 1]} : vector<2x128xf32> to vector<2x32xf32>
    %127 = vector.extract_strided_slice %125 {offsets = [0, 32], sizes = [2, 32], strides = [1, 1]} : vector<2x128xf32> to vector<2x32xf32>
    %128 = vector.extract_strided_slice %125 {offsets = [0, 64], sizes = [2, 32], strides = [1, 1]} : vector<2x128xf32> to vector<2x32xf32>
    %cst_31 = arith.constant 2.000000e+00 : f32
    %129 = vector.broadcast %cst_31 : f32 to vector<2x32xf32>
    %130 = arith.mulf %129, %128 : vector<2x32xf32>
    %cst_32 = arith.constant 1.000000e+00 : f32
    %131 = vector.broadcast %cst_32 : f32 to vector<2x32xf32>
    %132 = arith.subf %130, %131 : vector<2x32xf32>
    %133 = vector.extract_strided_slice %125 {offsets = [0, 96], sizes = [2, 32], strides = [1, 1]} : vector<2x128xf32> to vector<2x32xf32>
    %134 = arith.mulf %127, %115 : vector<2x32xf32>
    %135 = arith.mulf %126, %132 : vector<2x32xf32>
    %136 = arith.addf %134, %135 : vector<2x32xf32>
    %137 = math.tanh %136 : vector<2x32xf32>
    %138 = arith.mulf %133, %137 : vector<2x32xf32>
    %139 = vector.extract_strided_slice %30 {offsets = [10, 0], sizes = [2, 128], strides = [1, 1]} : vector<14x128xf32> to vector<2x128xf32>
    %cst_33 = arith.constant dense<0.000000e+00> : vector<2x128xf32>
    %140 = tpu.matmul %138, %31, %cst_33 {dimension_numbers = #tpu.dot_dimension_numbers<[1], [0], [0], [1], [0, 0, 1, 1], [], []>} : vector<2x32xf32>, vector<32x128xf32>, vector<2x128xf32> -> vector<2x128xf32>
    %141 = arith.addf %139, %140 : vector<2x128xf32>
    %142 = arith.negf %141 : vector<2x128xf32>
    %143 = math.exp %142 : vector<2x128xf32>
    %cst_34 = arith.constant 1.000000e+00 : f32
    %144 = vector.broadcast %cst_34 : f32 to vector<2x128xf32>
    %145 = arith.addf %144, %143 : vector<2x128xf32>
    %146 = arith.divf %144, %145 : vector<2x128xf32>
    %147 = vector.extract_strided_slice %146 {offsets = [0, 0], sizes = [2, 32], strides = [1, 1]} : vector<2x128xf32> to vector<2x32xf32>
    %148 = vector.extract_strided_slice %146 {offsets = [0, 32], sizes = [2, 32], strides = [1, 1]} : vector<2x128xf32> to vector<2x32xf32>
    %149 = vector.extract_strided_slice %146 {offsets = [0, 64], sizes = [2, 32], strides = [1, 1]} : vector<2x128xf32> to vector<2x32xf32>
    %cst_35 = arith.constant 2.000000e+00 : f32
    %150 = vector.broadcast %cst_35 : f32 to vector<2x32xf32>
    %151 = arith.mulf %150, %149 : vector<2x32xf32>
    %cst_36 = arith.constant 1.000000e+00 : f32
    %152 = vector.broadcast %cst_36 : f32 to vector<2x32xf32>
    %153 = arith.subf %151, %152 : vector<2x32xf32>
    %154 = vector.extract_strided_slice %146 {offsets = [0, 96], sizes = [2, 32], strides = [1, 1]} : vector<2x128xf32> to vector<2x32xf32>
    %155 = arith.mulf %148, %136 : vector<2x32xf32>
    %156 = arith.mulf %147, %153 : vector<2x32xf32>
    %157 = arith.addf %155, %156 : vector<2x32xf32>
    %158 = math.tanh %157 : vector<2x32xf32>
    %159 = arith.mulf %154, %158 : vector<2x32xf32>
    %160 = vector.extract_strided_slice %30 {offsets = [12, 0], sizes = [2, 128], strides = [1, 1]} : vector<14x128xf32> to vector<2x128xf32>
    %cst_37 = arith.constant dense<0.000000e+00> : vector<2x128xf32>
    %161 = tpu.matmul %159, %31, %cst_37 {dimension_numbers = #tpu.dot_dimension_numbers<[1], [0], [0], [1], [0, 0, 1, 1], [], []>} : vector<2x32xf32>, vector<32x128xf32>, vector<2x128xf32> -> vector<2x128xf32>
    %162 = arith.addf %160, %161 : vector<2x128xf32>
    %163 = arith.negf %162 : vector<2x128xf32>
    %164 = math.exp %163 : vector<2x128xf32>
    %cst_38 = arith.constant 1.000000e+00 : f32
    %165 = vector.broadcast %cst_38 : f32 to vector<2x128xf32>
    %166 = arith.addf %165, %164 : vector<2x128xf32>
    %167 = arith.divf %165, %166 : vector<2x128xf32>
    %168 = vector.extract_strided_slice %167 {offsets = [0, 0], sizes = [2, 32], strides = [1, 1]} : vector<2x128xf32> to vector<2x32xf32>
    %169 = vector.extract_strided_slice %167 {offsets = [0, 32], sizes = [2, 32], strides = [1, 1]} : vector<2x128xf32> to vector<2x32xf32>
    %170 = vector.extract_strided_slice %167 {offsets = [0, 64], sizes = [2, 32], strides = [1, 1]} : vector<2x128xf32> to vector<2x32xf32>
    %cst_39 = arith.constant 2.000000e+00 : f32
    %171 = vector.broadcast %cst_39 : f32 to vector<2x32xf32>
    %172 = arith.mulf %171, %170 : vector<2x32xf32>
    %cst_40 = arith.constant 1.000000e+00 : f32
    %173 = vector.broadcast %cst_40 : f32 to vector<2x32xf32>
    %174 = arith.subf %172, %173 : vector<2x32xf32>
    %175 = vector.extract_strided_slice %167 {offsets = [0, 96], sizes = [2, 32], strides = [1, 1]} : vector<2x128xf32> to vector<2x32xf32>
    %176 = arith.mulf %169, %157 : vector<2x32xf32>
    %177 = arith.mulf %168, %174 : vector<2x32xf32>
    %178 = arith.addf %176, %177 : vector<2x32xf32>
    %179 = math.tanh %178 : vector<2x32xf32>
    %180 = arith.mulf %175, %179 : vector<2x32xf32>
    %c96 = arith.constant 96 : index
    %c0_41 = arith.constant 0 : index
    %181 = vector.load %arg1[%c96, %c0_41] : memref<128x128xf32, #tpu.memory_space<vmem>>, vector<32x128xf32>
    %cst_42 = arith.constant dense<0.000000e+00> : vector<2x128xf32>
    %182 = tpu.matmul %180, %181, %cst_42 {dimension_numbers = #tpu.dot_dimension_numbers<[1], [0], [0], [1], [0, 0, 1, 1], [], []>} : vector<2x32xf32>, vector<32x128xf32>, vector<2x128xf32> -> vector<2x128xf32>
    %c2 = arith.constant 2 : index
    %c0_43 = arith.constant 0 : index
    %183 = vector.load %arg2[%c2, %c0_43] : memref<8x128xf32, #tpu.memory_space<vmem>>, vector<1x128xf32>
    %184 = vector.broadcast %183 : vector<1x128xf32> to vector<2x128xf32>
    %185 = arith.addf %182, %184 : vector<2x128xf32>
    %c0_44 = arith.constant 0 : index
    %c0_45 = arith.constant 0 : index
    %186 = vector.load %arg3[%c0_44, %c0_45] : memref<2x128xf32, #tpu.memory_space<vmem>>, vector<2x128xf32>
    tpu.vector_store %arg3[%c0_44, %c0_45], %185 {strides = array<i32>} : memref<2x128xf32, #tpu.memory_space<vmem>>, vector<2x128xf32>,
    return
  }
}

</mosaic_0001>

<llo_original>
// kernel: cnn_lstm_forward.1
$region0: #{cnn_lstm_forward.1}
  #allocation0 [shape = 'u32[]', space=smem, size = 0x4, offset = 0x4, fixed_abs, tag = 'smem constant byte address 0x4 - core index']
  #allocation1 [shape = 'u32[144,128]{1,0:T(1,128)}', space=vmem, size = 0x12000, scoped, tag = 'internal scratch']
  %s0 = inlined_call_operand.vmem [shape: s32[32,1], index: 0, kind: input, shape index: {}]
  %s1 = inlined_call_operand.hbm [shape: f32[128,128], index: 1, kind: input, shape index: {}]
  %s2 = inlined_call_operand.vmem [shape: f32[8,128], index: 2, kind: input, shape index: {}]
  %s3 = inlined_call_operand.hbm [shape: f32[2,128], index: 3, kind: output, shape index: {}]
  %s4 = sld [smem:[#allocation0]]
  $region26: #{cnn_lstm_forward.1} parent=0
    _
  %s6 = ssub.s32 1, %s4
  %s7 = scalar_select 0, %s6, %s4
  $region1: #{cnn_lstm_forward.1} parent=0
    #allocation2 [shape = 'u8[65536]{0}', space=vmem, size = 0x10000, scoped, tag = 'input window, operand 1, single buffered']
    #allocation3 [shape = 's32[1]{0}', space=sflag, size = 0x4, scoped, tag = 'scoped memory for cnn_lstm_forward.1']
    #allocation4 [shape = 's32[1]{0}', space=sflag, size = 0x4, scoped, tag = 'scoped memory for cnn_lstm_forward.1']
    #allocation5 [shape = 'u8[1024]{0}', space=vmem, size = 0x400, scoped, tag = 'output window, operand 0, single buffered']
    %8 = vsyncpa [#allocation3], 0
    %9 = vsyncpa [#allocation4], 0
    // Predicated region
    $region2: #{cnn_lstm_forward.1} parent=1 // pred_check
      _
    $region3: #{cnn_lstm_forward.1} parent=1 // pred_check_branch
      %11 = sbr.rel (0) target = $region5
    $region4: #{cnn_lstm_forward.1} parent=1 // pred_region
      _
    $region5: #{cnn_lstm_forward.1} parent=1 // pred_fallthru
      _
    // Predicated region
    $region6: #{cnn_lstm_forward.1} parent=1 // pred_check
      _
    $region7: #{cnn_lstm_forward.1} parent=1 // pred_check_branch
      %13 = sbr.rel (0) target = $region9
    $region8: #{cnn_lstm_forward.1} parent=1 // pred_region
      %s15 = ssub.s32 2048, 2048
      %16 = vsyncadd [#allocation3], %s15
      %s17 = sshll.u32 [#allocation2], 4
      %s18 = int_to_ptr.vmem [resolvable:$true] %s17
      %23 = dma.hbm_to_vmem [thread:$0]  %s1, 2048, %s18, [#allocation3], 128, 128, 8
    $region9: #{cnn_lstm_forward.1} parent=1 // pred_fallthru
      _
    // Predicated region
    $region10: #{cnn_lstm_forward.1} parent=1 // pred_check
      _
    $region11: #{cnn_lstm_forward.1} parent=1 // pred_check_branch
      %25 = sbr.rel (0) target = $region13
    $region12: #{cnn_lstm_forward.1} parent=1 // pred_region
      _
    $region13: #{cnn_lstm_forward.1} parent=1 // pred_fallthru
      _
    // Predicated region
    $region14: #{cnn_lstm_forward.1} parent=1 // pred_check
      _
    $region15: #{cnn_lstm_forward.1} parent=1 // pred_check_branch
      %27 = sbr.rel (0) target = $region17
    $region16: #{cnn_lstm_forward.1} parent=1 // pred_region
      %28 = dma.done [#allocation3], 2048
    $region17: #{cnn_lstm_forward.1} parent=1 // pred_fallthru
      _
    %v29 = vld [vmem:[%s0] sm:$0xff]
    %v30 = vld [vmem:[%s0 + $0x8] sm:$0xff]
    %v31 = vld [vmem:[%s0 + $0x10] sm:$0xff]
    %v32 = vld [vmem:[%s0 + $0x18] sm:$0xff]
    %v33 = vlaneseq
    %v34 = vand.u32 %v33, 127
    %35 = vset.pattern.permute.xlu0 0
    %36 = vperm.xlu0 %35, %v29
    %v37 = vpop.permute.xlu0 %36
    %38 = vset.pattern.permute.xlu0 0
    %39 = vperm.xlu0 %38, %v30
    %v40 = vpop.permute.xlu0 %39
    %41 = vset.pattern.permute.xlu0 0
    %42 = vperm.xlu0 %41, %v31
    %v43 = vpop.permute.xlu0 %42
    %44 = vset.pattern.permute.xlu0 0
    %45 = vperm.xlu0 %44, %v32
    %v46 = vpop.permute.xlu0 %45
    %vm47 = vcmp.eq.s32.totalorder %v37, %v34
    %vm48 = vcmp.eq.s32.totalorder %v40, %v34
    %vm49 = vcmp.eq.s32.totalorder %v43, %v34
    %vm50 = vcmp.eq.s32.totalorder %v46, %v34
    %v51 = vsel %vm47, 1, 0
    %v52 = vsel %vm48, 1, 0
    %v53 = vsel %vm49, 1, 0
    %v54 = vsel %vm50, 1, 0
    %v55 = vcvt.s32.f32 %v51
    %v56 = vcvt.s32.f32 %v52
    %v57 = vcvt.s32.f32 %v53
    %v58 = vcvt.s32.f32 %v54
    %v59 = vld [vmem:[#allocation2] sm:$0xff]
    %v60 = vld [vmem:[#allocation2 + $0x8] sm:$0xff]
    %v61 = vld [vmem:[#allocation2 + $0x10] sm:$0xff]
    %v62 = vld [vmem:[#allocation2 + $0x18] sm:$0xff]
    %vm63 = vcmask 261120
    %v65 = vsel %vm63, %v55, 0
    %v68 = vsel %vm63, %v56, 0
    %v71 = vsel %vm63, %v57, 0
    %v74 = vsel %vm63, %v58, 0
    %76 = vmatprep.subr.mxu0 0.0
    %77 = vmatpush1.msra.mxu0 %v59
    %78 = vmatprep.subr.mxu0 0.0
    %79 = vmatpush1.msra.mxu0 %v60
    %80 = vmatprep.subr.mxu0 0.0
    %81 = vmatpush1.msra.mxu0 %v61
    %82 = vmatprep.subr.mxu0 0.0
    %83 = vmatpush1.msra.mxu0 %v62
    %84 = vmatprep.subr.mxu0 0.0
    %85 = vmatpush1.msra.mxu0 0.0
    %86 = vmatprep.subr.mxu0 0.0
    %87 = vmatpush1.msra.mxu0 0.0
    %88 = vmatprep.subr.mxu0 0.0
    %89 = vmatpush1.msra.mxu0 0.0
    %90 = vmatprep.subr.mxu0 0.0
    %91 = vmatpush1.msra.mxu0 0.0
    %92 = vmatprep.subr.mxu0 0.0
    %93 = vmatpush1.msra.mxu0 0.0
    %94 = vmatprep.subr.mxu0 0.0
    %95 = vmatpush1.msra.mxu0 0.0
    %96 = vmatprep.subr.mxu0 0.0
    %97 = vmatpush1.msra.mxu0 0.0
    %98 = vmatprep.subr.mxu0 0.0
    %99 = vmatpush1.msra.mxu0 0.0
    %100 = vmatprep.subr.mxu0 0.0
    %101 = vmatpush1.msra.mxu0 0.0
    %102 = vmatprep.subr.mxu0 0.0
    %103 = vmatpush1.msra.mxu0 0.0
    %104 = vmatprep.subr.mxu0 0.0
    %105 = vmatpush1.msra.mxu0 0.0
    %106 = vmatprep.subr.mxu0 0.0
    %107 = vmatpush1.msra.mxu0 0.0
    %108 = vmatprep.subr.mxu0 0.0
    %109 = vmatpush1.msra.mxu0 0.0
    %110 = vmatprep.subr.mxu0 0.0
    %111 = vmatpush1.msra.mxu0 0.0
    %112 = vmatprep.subr.mxu0 0.0
    %113 = vmatpush1.msra.mxu0 0.0
    %114 = vmatprep.subr.mxu0 0.0
    %115 = vmatpush1.msra.mxu0 0.0
    %116 = vmatprep.subr.mxu0 0.0
    %117 = vmatpush1.msra.mxu0 0.0
    %118 = vmatprep.subr.mxu0 0.0
    %119 = vmatpush1.msra.mxu0 0.0
    %120 = vmatprep.subr.mxu0 0.0
    %121 = vmatpush1.msra.mxu0 0.0
    %122 = vmatprep.subr.mxu0 0.0
    %123 = vmatpush1.msra.mxu0 0.0
    %124 = vmatprep.subr.mxu0 0.0
    %125 = vmatpush1.msra.mxu0 0.0
    %126 = vmatprep.subr.mxu0 0.0
    %127 = vmatpush1.msra.mxu0 0.0
    %128 = vmatprep.subr.mxu0 0.0
    %129 = vmatpush1.msra.mxu0 0.0
    %130 = vmatprep.subr.mxu0 0.0
    %131 = vmatpush1.msra.mxu0 0.0
    %132 = vmatprep.subr.mxu0 0.0
    %133 = vmatpush1.msra.mxu0 0.0
    %134 = vmatprep.subr.mxu0 0.0
    %135 = vmatpush1.msra.mxu0 0.0
    %136 = vmatprep.subr.mxu0 0.0
    %137 = vmatpush1.msra.mxu0 0.0
    %138 = vmatprep.subr.mxu0 0.0
    %139 = vmatpush1.msra.mxu0 0.0
    %140 = vmatprep.mubr.f32.mxu0 0.0
    %141 = vmatmul.mubr.f32.gmra.mrb[0].mxu0 %v65
    %v142 = vpop.f32.mrb[0].mxu0
    %v143 = vadd.f32 0.0, %v142
    %v144 = vpop.f32.mrb[0].mxu0
    %145 = vmatprep.mubr.f32.mxu0 0.0
    %146 = vmatmul.mubr.f32.gmra.mrb[0].mxu0 %v68
    %v147 = vpop.f32.mrb[0].mxu0
    %v148 = vadd.f32 0.0, %v147
    %v149 = vpop.f32.mrb[0].mxu0
    %150 = vmatprep.mubr.f32.mxu0 0.0
    %151 = vmatmul.mubr.f32.gmra.mrb[0].mxu0 %v71
    %v152 = vpop.f32.mrb[0].mxu0
    %v153 = vadd.f32 0.0, %v152
    %v154 = vpop.f32.mrb[0].mxu0
    %155 = vmatprep.mubr.f32.mxu0 0.0
    %156 = vmatmul.mubr.f32.gmra.mrb[0].mxu0 %v74
    %v157 = vpop.f32.mrb[0].mxu0
    %v158 = vadd.f32 0.0, %v157
    %v159 = vpop.f32.mrb[0].mxu0
    %160 = vdwg.mxu0
    %vm165 = vcmask 1046528
    %v166 = vrot.slane %v143, 1
    %v167 = vrot.slane %v148, 1
    %v168 = vsel %vm165, %v166, %v167
    %v169 = vrot.slane %v153, 1
    %v170 = vrot.slane %v158, 1
    %v171 = vsel %vm165, %v169, %v170
    %172 = vrot.lane.b32.xlu0 %v168, 96
    %v173 = vpop.permute.xlu0 %172
    %174 = vrot.lane.b32.xlu0 %v167, 96
    %v175 = vpop.permute.xlu0 %174
    %176 = vrot.lane.b32.xlu0 %v171, 96
    %v177 = vpop.permute.xlu0 %176
    %178 = vrot.lane.b32.xlu0 %v170, 96
    %v179 = vpop.permute.xlu0 %178
    %v184 = vadd.f32 %v143, %v173
    %v185 = vadd.f32 %v148, %v175
    %v186 = vadd.f32 %v153, %v177
    %v187 = vadd.f32 %v158, %v179
    %vm188 = vcmask 1045504
    %v189 = vrot.slane %v143, 2
    %v190 = vrot.slane %v148, 2
    %v191 = vsel %vm188, %v189, %v190
    %v192 = vrot.slane %v153, 2
    %v193 = vrot.slane %v158, 2
    %v194 = vsel %vm188, %v192, %v193
    %195 = vrot.lane.b32.xlu0 %v191, 64
    %v196 = vpop.permute.xlu0 %195
    %197 = vrot.lane.b32.xlu0 %v190, 64
    %v198 = vpop.permute.xlu0 %197
    %199 = vrot.lane.b32.xlu0 %v194, 64
    %v200 = vpop.permute.xlu0 %199
    %201 = vrot.lane.b32.xlu0 %v193, 64
    %v202 = vpop.permute.xlu0 %201
    %v207 = vadd.f32 %v184, %v196
    %v208 = vadd.f32 %v185, %v198
    %v209 = vadd.f32 %v186, %v200
    %v210 = vadd.f32 %v187, %v202
    %v211 = vld [vmem:[%s2] sm:$0x1]
    %v212 = vlaneseq
    %v213 = vshrl.u32 %v212, 7
    %v214 = vsub.s32 0, %v213
    %v215 = vrot.slane %v211, %v214
    %v216 = vadd.f32 %v207, %v215
    %v217 = vadd.f32 %v208, %v215
    %v218 = vadd.f32 %v209, %v215
    %v219 = vadd.f32 %v210, %v215
    %v220 = vmax.f32 %v216, 0.0
    %v221 = vmax.f32 %v217, 0.0
    %v222 = vmax.f32 %v218, 0.0
    %v223 = vmax.f32 %v219, 0.0
    %v228 = vcombine.high %v220, %v220
    %v230 = vunpack.c.l.s4 1983009808
    %v231 = vunpack.c.0.s8 %v230
    %v232 = vlaneseq
    %v233 = vshrl.u32 %v232, 7
    %v234 = vsub.s32 %v231, %v233
    %v235 = vrot.slane %v220, %v234
    %v237 = vunpack.c.l.s4 1983009808
    %v238 = vunpack.c.0.s8 %v237
    %v239 = vlaneseq
    %v240 = vshrl.u32 %v239, 7
    %v241 = vsub.s32 %v238, %v240
    %v242 = vrot.slane %v228, %v241
    %v243 = vcombine.high %v235, %v235
    %v244 = vcombine.high %v242, %v242
    %v245 = vcombine.high %v221, %v221
    %v247 = vunpack.c.l.s4 1983009808
    %v248 = vunpack.c.0.s8 %v247
    %v249 = vlaneseq
    %v250 = vshrl.u32 %v249, 7
    %v251 = vsub.s32 %v248, %v250
    %v252 = vrot.slane %v221, %v251
    %v254 = vunpack.c.l.s4 1983009808
    %v255 = vunpack.c.0.s8 %v254
    %v256 = vlaneseq
    %v257 = vshrl.u32 %v256, 7
    %v258 = vsub.s32 %v255, %v257
    %v259 = vrot.slane %v245, %v258
    %v260 = vcombine.high %v252, %v252
    %v261 = vcombine.high %v222, %v222
    %v263 = vunpack.c.l.s4 1983009808
    %v264 = vunpack.c.0.s8 %v263
    %v265 = vlaneseq
    %v266 = vshrl.u32 %v265, 7
    %v267 = vsub.s32 %v264, %v266
    %v268 = vrot.slane %v222, %v267
    %v270 = vunpack.c.l.s4 1983009808
    %v271 = vunpack.c.0.s8 %v270
    %v272 = vlaneseq
    %v273 = vshrl.u32 %v272, 7
    %v274 = vsub.s32 %v271, %v273
    %v275 = vrot.slane %v261, %v274
    %v276 = vcombine.high %v268, %v268
    %v277 = vcombine.high %v275, %v275
    %v278 = vcombine.high %v223, %v223
    %v280 = vunpack.c.l.s4 1983009808
    %v281 = vunpack.c.0.s8 %v280
    %v282 = vlaneseq
    %v283 = vshrl.u32 %v282, 7
    %v284 = vsub.s32 %v281, %v283
    %v285 = vrot.slane %v223, %v284
    %v287 = vunpack.c.l.s4 1983009808
    %v288 = vunpack.c.0.s8 %v287
    %v289 = vlaneseq
    %v290 = vshrl.u32 %v289, 7
    %v291 = vsub.s32 %v288, %v290
    %v292 = vrot.slane %v278, %v291
    %v293 = vcombine.high %v285, %v285
    %vm308 = vcmask 254976
    %v309 = vsel %vm308, %v235, -inf
    %v310 = vrot.slane %v309, 4
    %v311 = vmax.f32 %v309, %v310
    %v312 = vrot.slane %v311, 2
    %v313 = vmax.f32 %v311, %v312
    %v314 = vrot.slane %v313, 1
    %v315 = vmax.f32 %v313, %v314
    %v316 = vsel %vm308, %v243, -inf
    %v317 = vrot.slane %v316, 4
    %v318 = vmax.f32 %v316, %v317
    %v319 = vrot.slane %v318, 2
    %v320 = vmax.f32 %v318, %v319
    %v321 = vrot.slane %v320, 1
    %v322 = vmax.f32 %v320, %v321
    %v323 = vsel %vm308, %v242, -inf
    %v324 = vrot.slane %v323, 4
    %v325 = vmax.f32 %v323, %v324
    %v326 = vrot.slane %v325, 2
    %v327 = vmax.f32 %v325, %v326
    %v328 = vrot.slane %v327, 1
    %v329 = vmax.f32 %v327, %v328
    %v330 = vsel %vm308, %v244, -inf
    %v331 = vrot.slane %v330, 4
    %v332 = vmax.f32 %v330, %v331
    %v333 = vrot.slane %v332, 2
    %v334 = vmax.f32 %v332, %v333
    %v335 = vrot.slane %v334, 1
    %v336 = vmax.f32 %v334, %v335
    %v337 = vsel %vm308, %v252, -inf
    %v338 = vrot.slane %v337, 4
    %v339 = vmax.f32 %v337, %v338
    %v340 = vrot.slane %v339, 2
    %v341 = vmax.f32 %v339, %v340
    %v342 = vrot.slane %v341, 1
    %v343 = vmax.f32 %v341, %v342
    %v344 = vsel %vm308, %v260, -inf
    %v345 = vrot.slane %v344, 4
    %v346 = vmax.f32 %v344, %v345
    %v347 = vrot.slane %v346, 2
    %v348 = vmax.f32 %v346, %v347
    %v349 = vrot.slane %v348, 1
    %v350 = vmax.f32 %v348, %v349
    %v351 = vsel %vm308, %v259, -inf
    %v352 = vrot.slane %v351, 4
    %v353 = vmax.f32 %v351, %v352
    %v354 = vrot.slane %v353, 2
    %v355 = vmax.f32 %v353, %v354
    %v356 = vrot.slane %v355, 1
    %v357 = vmax.f32 %v355, %v356
    %v358 = vsel %vm308, %v268, -inf
    %v359 = vrot.slane %v358, 4
    %v360 = vmax.f32 %v358, %v359
    %v361 = vrot.slane %v360, 2
    %v362 = vmax.f32 %v360, %v361
    %v363 = vrot.slane %v362, 1
    %v364 = vmax.f32 %v362, %v363
    %v365 = vsel %vm308, %v276, -inf
    %v366 = vrot.slane %v365, 4
    %v367 = vmax.f32 %v365, %v366
    %v368 = vrot.slane %v367, 2
    %v369 = vmax.f32 %v367, %v368
    %v370 = vrot.slane %v369, 1
    %v371 = vmax.f32 %v369, %v370
    %v372 = vsel %vm308, %v275, -inf
    %v373 = vrot.slane %v372, 4
    %v374 = vmax.f32 %v372, %v373
    %v375 = vrot.slane %v374, 2
    %v376 = vmax.f32 %v374, %v375
    %v377 = vrot.slane %v376, 1
    %v378 = vmax.f32 %v376, %v377
    %v379 = vsel %vm308, %v277, -inf
    %v380 = vrot.slane %v379, 4
    %v381 = vmax.f32 %v379, %v380
    %v382 = vrot.slane %v381, 2
    %v383 = vmax.f32 %v381, %v382
    %v384 = vrot.slane %v383, 1
    %v385 = vmax.f32 %v383, %v384
    %v386 = vsel %vm308, %v285, -inf
    %v387 = vrot.slane %v386, 4
    %v388 = vmax.f32 %v386, %v387
    %v389 = vrot.slane %v388, 2
    %v390 = vmax.f32 %v388, %v389
    %v391 = vrot.slane %v390, 1
    %v392 = vmax.f32 %v390, %v391
    %v393 = vsel %vm308, %v293, -inf
    %v394 = vrot.slane %v393, 4
    %v395 = vmax.f32 %v393, %v394
    %v396 = vrot.slane %v395, 2
    %v397 = vmax.f32 %v395, %v396
    %v398 = vrot.slane %v397, 1
    %v399 = vmax.f32 %v397, %v398
    %v400 = vsel %vm308, %v292, -inf
    %v401 = vrot.slane %v400, 4
    %v402 = vmax.f32 %v400, %v401
    %v403 = vrot.slane %v402, 2
    %v404 = vmax.f32 %v402, %v403
    %v405 = vrot.slane %v404, 1
    %v406 = vmax.f32 %v404, %v405
    %vm421 = vcmask 1041409
    %v422 = vsel %vm421, %v322, %v315
    %vm423 = vcmask 1042434
    %v424 = vsel %vm423, %v329, %v422
    %vm425 = vcmask 1043459
    %v426 = vsel %vm425, %v336, %v424
    %vm427 = vcmask 1044484
    %v428 = vsel %vm427, %v343, %v426
    %vm429 = vcmask 1045509
    %v430 = vsel %vm429, %v350, %v428
    %vm431 = vcmask 1046534
    %v432 = vsel %vm431, %v357, %v430
    %v433 = vsel %vm421, %v371, %v364
    %v434 = vsel %vm423, %v378, %v433
    %v435 = vsel %vm425, %v385, %v434
    %v436 = vsel %vm427, %v392, %v435
    %v437 = vsel %vm429, %v399, %v436
    %v438 = vsel %vm431, %v406, %v437
    %v441 = vcombine.high %v432, 0.0
    %v443 = vunpack.c.l.s4 1983009808
    %v444 = vunpack.c.0.s8 %v443
    %v445 = vlaneseq
    %v446 = vshrl.u32 %v445, 7
    %v447 = vsub.s32 %v444, %v446
    %v448 = vrot.slane %v432, %v447
    %v450 = vunpack.c.l.s4 1983009808
    %v451 = vunpack.c.0.s8 %v450
    %v452 = vlaneseq
    %v453 = vshrl.u32 %v452, 7
    %v454 = vsub.s32 %v451, %v453
    %v455 = vrot.slane %v441, %v454
    %v456 = vcombine.high %v438, 0.0
    %v458 = vunpack.c.l.s4 1983009808
    %v459 = vunpack.c.0.s8 %v458
    %v460 = vlaneseq
    %v461 = vshrl.u32 %v460, 7
    %v462 = vsub.s32 %v459, %v461
    %v463 = vrot.slane %v438, %v462
    %v465 = vunpack.c.l.s4 1983009808
    %v466 = vunpack.c.0.s8 %v465
    %v467 = vlaneseq
    %v468 = vshrl.u32 %v467, 7
    %v469 = vsub.s32 %v466, %v468
    %v470 = vrot.slane %v456, %v469
    %v471 = vcombine.low %v448, %v463
    %v472 = vcombine.high %v448, %v463
    %v474 = vunpack.c.l.s4 1934713408
    %v475 = vunpack.c.0.s8 %v474
    %v476 = vlaneseq
    %v477 = vshrl.u32 %v476, 7
    %v478 = vsub.s32 %v475, %v477
    %v479 = vrot.slane %v471, %v478
    %v481 = vunpack.c.l.s4 1934713408
    %v482 = vunpack.c.0.s8 %v481
    %v483 = vlaneseq
    %v484 = vshrl.u32 %v483, 7
    %v485 = vsub.s32 %v482, %v484
    %v486 = vrot.slane %v472, %v485
    %v487 = vcombine.low %v455, %v470
    %v488 = vcombine.high %v455, %v470
    %v490 = vunpack.c.l.s4 1934713408
    %v491 = vunpack.c.0.s8 %v490
    %v492 = vlaneseq
    %v493 = vshrl.u32 %v492, 7
    %v494 = vsub.s32 %v491, %v493
    %v495 = vrot.slane %v487, %v494
    %v496 = vcombine.high %v479, 0.0
    %v497 = vcombine.high %v486, 0.0
    %v498 = vcombine.high %v495, 0.0
    %v500 = vunpack.c.l.s4 1934713408
    %v501 = vunpack.c.0.s8 %v500
    %v502 = vlaneseq
    %v503 = vshrl.u32 %v502, 7
    %v504 = vsub.s32 %v501, %v503
    %v505 = vrot.slane %v488, %v504
    %v506 = vld [vmem:[#allocation2 + $0x20] sm:$0xff]
    %v507 = vld [vmem:[#allocation2 + $0x28] sm:$0xff]
    %v508 = vld [vmem:[#allocation2 + $0x30] sm:$0xff]
    %v509 = vld [vmem:[#allocation2 + $0x38] sm:$0xff]
    %v510 = vld [vmem:[%s2 + $0x1] sm:$0x1]
    %v511 = vlaneseq
    %v512 = vshrl.u32 %v511, 7
    %v513 = vsub.s32 0, %v512
    %v514 = vrot.slane %v510, %v513
    %v522 = vcombine.low %v479, %v496
    %v523 = vcombine.low %v486, %v497
    %v525 = vunpack.c.l.s4 1983009808
    %v526 = vunpack.c.0.s8 %v525
    %v527 = vlaneseq
    %v528 = vshrl.u32 %v527, 7
    %v529 = vsub.s32 %v526, %v528
    %v530 = vrot.slane %v522, %v529
    %v532 = vunpack.c.l.s4 1983009808
    %v533 = vunpack.c.0.s8 %v532
    %v534 = vlaneseq
    %v535 = vshrl.u32 %v534, 7
    %v536 = vsub.s32 %v533, %v535
    %v537 = vrot.slane %v523, %v536
    %v538 = vcombine.low %v530, %v537
    %v539 = vcombine.low %v495, %v498
    %v541 = vunpack.c.l.s4 1983009808
    %v542 = vunpack.c.0.s8 %v541
    %v543 = vlaneseq
    %v544 = vshrl.u32 %v543, 7
    %v545 = vsub.s32 %v542, %v544
    %v546 = vrot.slane %v539, %v545
    %v548 = vunpack.c.l.s4 1983009808
    %v549 = vunpack.c.0.s8 %v548
    %v550 = vlaneseq
    %v551 = vshrl.u32 %v550, 7
    %v552 = vsub.s32 %v549, %v551
    %v553 = vrot.slane %v505, %v552
    %v554 = vcombine.low %v546, %v553
    %v555 = vsel %vm63, %v538, 0
    %v557 = vsel %vm63, %v554, 0
    %559 = vmatprep.subr.mxu0 0.0
    %560 = vmatpush1.msra.mxu0 %v506
    %561 = vmatprep.subr.mxu0 0.0
    %562 = vmatpush1.msra.mxu0 %v507
    %563 = vmatprep.subr.mxu0 0.0
    %564 = vmatpush1.msra.mxu0 %v508
    %565 = vmatprep.subr.mxu0 0.0
    %566 = vmatpush1.msra.mxu0 %v509
    %567 = vmatprep.subr.mxu0 0.0
    %568 = vmatpush1.msra.mxu0 0.0
    %569 = vmatprep.subr.mxu0 0.0
    %570 = vmatpush1.msra.mxu0 0.0
    %571 = vmatprep.subr.mxu0 0.0
    %572 = vmatpush1.msra.mxu0 0.0
    %573 = vmatprep.subr.mxu0 0.0
    %574 = vmatpush1.msra.mxu0 0.0
    %575 = vmatprep.subr.mxu0 0.0
    %576 = vmatpush1.msra.mxu0 0.0
    %577 = vmatprep.subr.mxu0 0.0
    %578 = vmatpush1.msra.mxu0 0.0
    %579 = vmatprep.subr.mxu0 0.0
    %580 = vmatpush1.msra.mxu0 0.0
    %581 = vmatprep.subr.mxu0 0.0
    %582 = vmatpush1.msra.mxu0 0.0
    %583 = vmatprep.subr.mxu0 0.0
    %584 = vmatpush1.msra.mxu0 0.0
    %585 = vmatprep.subr.mxu0 0.0
    %586 = vmatpush1.msra.mxu0 0.0
    %587 = vmatprep.subr.mxu0 0.0
    %588 = vmatpush1.msra.mxu0 0.0
    %589 = vmatprep.subr.mxu0 0.0
    %590 = vmatpush1.msra.mxu0 0.0
    %591 = vmatprep.subr.mxu0 0.0
    %592 = vmatpush1.msra.mxu0 0.0
    %593 = vmatprep.subr.mxu0 0.0
    %594 = vmatpush1.msra.mxu0 0.0
    %595 = vmatprep.subr.mxu0 0.0
    %596 = vmatpush1.msra.mxu0 0.0
    %597 = vmatprep.subr.mxu0 0.0
    %598 = vmatpush1.msra.mxu0 0.0
    %599 = vmatprep.subr.mxu0 0.0
    %600 = vmatpush1.msra.mxu0 0.0
    %601 = vmatprep.subr.mxu0 0.0
    %602 = vmatpush1.msra.mxu0 0.0
    %603 = vmatprep.subr.mxu0 0.0
    %604 = vmatpush1.msra.mxu0 0.0
    %605 = vmatprep.subr.mxu0 0.0
    %606 = vmatpush1.msra.mxu0 0.0
    %607 = vmatprep.subr.mxu0 0.0
    %608 = vmatpush1.msra.mxu0 0.0
    %609 = vmatprep.subr.mxu0 0.0
    %610 = vmatpush1.msra.mxu0 0.0
    %611 = vmatprep.subr.mxu0 0.0
    %612 = vmatpush1.msra.mxu0 0.0
    %613 = vmatprep.subr.mxu0 0.0
    %614 = vmatpush1.msra.mxu0 0.0
    %615 = vmatprep.subr.mxu0 0.0
    %616 = vmatpush1.msra.mxu0 0.0
    %617 = vmatprep.subr.mxu0 0.0
    %618 = vmatpush1.msra.mxu0 0.0
    %619 = vmatprep.subr.mxu0 0.0
    %620 = vmatpush1.msra.mxu0 0.0
    %621 = vmatprep.subr.mxu0 0.0
    %622 = vmatpush1.msra.mxu0 0.0
    %623 = vmatprep.mubr.f32.mxu0 0.0
    %624 = vmatmul.mubr.f32.gmra.mrb[0].mxu0 %v555
    %v625 = vpop.f32.mrb[0].mxu0
    %v626 = vadd.f32 %v514, %v625
    %v627 = vpop.f32.mrb[0].mxu0
    %628 = vmatprep.mubr.f32.mxu0 0.0
    %629 = vmatmul.mubr.f32.gmra.mrb[0].mxu0 %v557
    %v630 = vpop.f32.mrb[0].mxu0
    %v631 = vadd.f32 %v514, %v630
    %v632 = vpop.f32.mrb[0].mxu0
    %633 = vdwg.mxu0
    %v634 = vld [vmem:[#allocation2 + $0x40] sm:$0xff]
    %v635 = vld [vmem:[#allocation2 + $0x48] sm:$0xff]
    %v636 = vld [vmem:[#allocation2 + $0x50] sm:$0xff]
    %v637 = vld [vmem:[#allocation2 + $0x58] sm:$0xff]
    %v639 = vsel %vm63, 0.0, 0
    %641 = vmatprep.subr.mxu0 0.0
    %642 = vmatpush1.msra.mxu0 %v634
    %643 = vmatprep.subr.mxu0 0.0
    %644 = vmatpush1.msra.mxu0 %v635
    %645 = vmatprep.subr.mxu0 0.0
    %646 = vmatpush1.msra.mxu0 %v636
    %647 = vmatprep.subr.mxu0 0.0
    %648 = vmatpush1.msra.mxu0 %v637
    %649 = vmatprep.subr.mxu0 0.0
    %650 = vmatpush1.msra.mxu0 0.0
    %651 = vmatprep.subr.mxu0 0.0
    %652 = vmatpush1.msra.mxu0 0.0
    %653 = vmatprep.subr.mxu0 0.0
    %654 = vmatpush1.msra.mxu0 0.0
    %655 = vmatprep.subr.mxu0 0.0
    %656 = vmatpush1.msra.mxu0 0.0
    %657 = vmatprep.subr.mxu0 0.0
    %658 = vmatpush1.msra.mxu0 0.0
    %659 = vmatprep.subr.mxu0 0.0
    %660 = vmatpush1.msra.mxu0 0.0
    %661 = vmatprep.subr.mxu0 0.0
    %662 = vmatpush1.msra.mxu0 0.0
    %663 = vmatprep.subr.mxu0 0.0
    %664 = vmatpush1.msra.mxu0 0.0
    %665 = vmatprep.subr.mxu0 0.0
    %666 = vmatpush1.msra.mxu0 0.0
    %667 = vmatprep.subr.mxu0 0.0
    %668 = vmatpush1.msra.mxu0 0.0
    %669 = vmatprep.subr.mxu0 0.0
    %670 = vmatpush1.msra.mxu0 0.0
    %671 = vmatprep.subr.mxu0 0.0
    %672 = vmatpush1.msra.mxu0 0.0
    %673 = vmatprep.subr.mxu0 0.0
    %674 = vmatpush1.msra.mxu0 0.0
    %675 = vmatprep.subr.mxu0 0.0
    %676 = vmatpush1.msra.mxu0 0.0
    %677 = vmatprep.subr.mxu0 0.0
    %678 = vmatpush1.msra.mxu0 0.0
    %679 = vmatprep.subr.mxu0 0.0
    %680 = vmatpush1.msra.mxu0 0.0
    %681 = vmatprep.subr.mxu0 0.0
    %682 = vmatpush1.msra.mxu0 0.0
    %683 = vmatprep.subr.mxu0 0.0
    %684 = vmatpush1.msra.mxu0 0.0
    %685 = vmatprep.subr.mxu0 0.0
    %686 = vmatpush1.msra.mxu0 0.0
    %687 = vmatprep.subr.mxu0 0.0
    %688 = vmatpush1.msra.mxu0 0.0
    %689 = vmatprep.subr.mxu0 0.0
    %690 = vmatpush1.msra.mxu0 0.0
    %691 = vmatprep.subr.mxu0 0.0
    %692 = vmatpush1.msra.mxu0 0.0
    %693 = vmatprep.subr.mxu0 0.0
    %694 = vmatpush1.msra.mxu0 0.0
    %695 = vmatprep.subr.mxu0 0.0
    %696 = vmatpush1.msra.mxu0 0.0
    %697 = vmatprep.subr.mxu0 0.0
    %698 = vmatpush1.msra.mxu0 0.0
    %699 = vmatprep.subr.mxu0 0.0
    %700 = vmatpush1.msra.mxu0 0.0
    %701 = vmatprep.subr.mxu0 0.0
    %702 = vmatpush1.msra.mxu0 0.0
    %703 = vmatprep.subr.mxu0 0.0
    %704 = vmatpush1.msra.mxu0 0.0
    %705 = vmatprep.mubr.f32.mxu0 0.0
    %706 = vmatmul.mubr.f32.gmra.mrb[0].mxu0 %v639
    %v707 = vpop.f32.mrb[0].mxu0
    %v708 = vadd.f32 0.0, %v707
    %v709 = vpop.f32.mrb[0].mxu0
    %710 = vdwg.mxu0
    %v711 = vadd.f32 %v626, %v708
    %v712 = vxor.u32 %v711, 2147483648
    %v713 = vmul.f32 %v712, 1.442695
    %v714 = vpow.pop %v713
    %v715 = vadd.f32 %v714, 1.0
    %v716 = vrcp.pop %v715
    %v717 = vmul.f32 1.0, %v716
    %v718 = vmul.f32 %v717, 2.0
    %v719 = vsub.f32 %v718, 1.0
    %v720 = vmul.f32 %v717, 0.0
    %722 = vrot.lane.b32.xlu0 %v719, 64
    %v723 = vpop.permute.xlu0 %722
    %v725 = vmul.f32 %v717, %v723
    %727 = vrot.lane.b32.xlu0 %v725, 32
    %v728 = vpop.permute.xlu0 %727
    %v730 = vadd.f32 %v720, %v728
    %v731 = vtanh.pop %v730
    %733 = vrot.lane.b32.xlu0 %v731, 64
    %v734 = vpop.permute.xlu0 %733
    %v736 = vmul.f32 %v717, %v734
    %738 = vrot.lane.b32.xlu0 %v736, 32
    %v739 = vpop.permute.xlu0 %738
    %v740 = vsel %vm63, %v739, 0
    %742 = vmatprep.subr.mxu0 0.0
    %743 = vmatpush1.msra.mxu0 %v634
    %744 = vmatprep.subr.mxu0 0.0
    %745 = vmatpush1.msra.mxu0 %v635
    %746 = vmatprep.subr.mxu0 0.0
    %747 = vmatpush1.msra.mxu0 %v636
    %748 = vmatprep.subr.mxu0 0.0
    %749 = vmatpush1.msra.mxu0 %v637
    %750 = vmatprep.subr.mxu0 0.0
    %751 = vmatpush1.msra.mxu0 0.0
    %752 = vmatprep.subr.mxu0 0.0
    %753 = vmatpush1.msra.mxu0 0.0
    %754 = vmatprep.subr.mxu0 0.0
    %755 = vmatpush1.msra.mxu0 0.0
    %756 = vmatprep.subr.mxu0 0.0
    %757 = vmatpush1.msra.mxu0 0.0
    %758 = vmatprep.subr.mxu0 0.0
    %759 = vmatpush1.msra.mxu0 0.0
    %760 = vmatprep.subr.mxu0 0.0
    %761 = vmatpush1.msra.mxu0 0.0
    %762 = vmatprep.subr.mxu0 0.0
    %763 = vmatpush1.msra.mxu0 0.0
    %764 = vmatprep.subr.mxu0 0.0
    %765 = vmatpush1.msra.mxu0 0.0
    %766 = vmatprep.subr.mxu0 0.0
    %767 = vmatpush1.msra.mxu0 0.0
    %768 = vmatprep.subr.mxu0 0.0
    %769 = vmatpush1.msra.mxu0 0.0
    %770 = vmatprep.subr.mxu0 0.0
    %771 = vmatpush1.msra.mxu0 0.0
    %772 = vmatprep.subr.mxu0 0.0
    %773 = vmatpush1.msra.mxu0 0.0
    %774 = vmatprep.subr.mxu0 0.0
    %775 = vmatpush1.msra.mxu0 0.0
    %776 = vmatprep.subr.mxu0 0.0
    %777 = vmatpush1.msra.mxu0 0.0
    %778 = vmatprep.subr.mxu0 0.0
    %779 = vmatpush1.msra.mxu0 0.0
    %780 = vmatprep.subr.mxu0 0.0
    %781 = vmatpush1.msra.mxu0 0.0
    %782 = vmatprep.subr.mxu0 0.0
    %783 = vmatpush1.msra.mxu0 0.0
    %784 = vmatprep.subr.mxu0 0.0
    %785 = vmatpush1.msra.mxu0 0.0
    %786 = vmatprep.subr.mxu0 0.0
    %787 = vmatpush1.msra.mxu0 0.0
    %788 = vmatprep.subr.mxu0 0.0
    %789 = vmatpush1.msra.mxu0 0.0
    %790 = vmatprep.subr.mxu0 0.0
    %791 = vmatpush1.msra.mxu0 0.0
    %792 = vmatprep.subr.mxu0 0.0
    %793 = vmatpush1.msra.mxu0 0.0
    %794 = vmatprep.subr.mxu0 0.0
    %795 = vmatpush1.msra.mxu0 0.0
    %796 = vmatprep.subr.mxu0 0.0
    %797 = vmatpush1.msra.mxu0 0.0
    %798 = vmatprep.subr.mxu0 0.0
    %799 = vmatpush1.msra.mxu0 0.0
    %800 = vmatprep.subr.mxu0 0.0
    %801 = vmatpush1.msra.mxu0 0.0
    %802 = vmatprep.subr.mxu0 0.0
    %803 = vmatpush1.msra.mxu0 0.0
    %804 = vmatprep.subr.mxu0 0.0
    %805 = vmatpush1.msra.mxu0 0.0
    %806 = vmatprep.mubr.f32.mxu0 0.0
    %807 = vmatmul.mubr.f32.gmra.mrb[0].mxu0 %v740
    %v808 = vpop.f32.mrb[0].mxu0
    %v809 = vadd.f32 0.0, %v808
    %v810 = vpop.f32.mrb[0].mxu0
    %811 = vdwg.mxu0
    %v813 = vrot.slane %v809, 6
    %v815 = vadd.f32 %v626, %v813
    %v816 = vxor.u32 %v815, 2147483648
    %v817 = vmul.f32 %v816, 1.442695
    %v818 = vpow.pop %v817
    %v819 = vadd.f32 %v818, 1.0
    %v820 = vrcp.pop %v819
    %v821 = vmul.f32 1.0, %v820
    %v822 = vmul.f32 %v821, 2.0
    %v823 = vsub.f32 %v822, 1.0
    %v825 = vrot.slane %v730, 6
    %v827 = vmul.f32 %v821, %v825
    %829 = vrot.lane.b32.xlu0 %v823, 64
    %v830 = vpop.permute.xlu0 %829
    %v832 = vmul.f32 %v821, %v830
    %834 = vrot.lane.b32.xlu0 %v832, 32
    %v835 = vpop.permute.xlu0 %834
    %v837 = vadd.f32 %v827, %v835
    %v838 = vtanh.pop %v837
    %840 = vrot.lane.b32.xlu0 %v838, 64
    %v841 = vpop.permute.xlu0 %840
    %v843 = vmul.f32 %v821, %v841
    %v845 = vrot.slane %v843, 2
    %846 = vrot.lane.b32.xlu0 %v845, 32
    %v847 = vpop.permute.xlu0 %846
    %v848 = vsel %vm63, %v847, 0
    %850 = vmatprep.subr.mxu0 0.0
    %851 = vmatpush1.msra.mxu0 %v634
    %852 = vmatprep.subr.mxu0 0.0
    %853 = vmatpush1.msra.mxu0 %v635
    %854 = vmatprep.subr.mxu0 0.0
    %855 = vmatpush1.msra.mxu0 %v636
    %856 = vmatprep.subr.mxu0 0.0
    %857 = vmatpush1.msra.mxu0 %v637
    %858 = vmatprep.subr.mxu0 0.0
    %859 = vmatpush1.msra.mxu0 0.0
    %860 = vmatprep.subr.mxu0 0.0
    %861 = vmatpush1.msra.mxu0 0.0
    %862 = vmatprep.subr.mxu0 0.0
    %863 = vmatpush1.msra.mxu0 0.0
    %864 = vmatprep.subr.mxu0 0.0
    %865 = vmatpush1.msra.mxu0 0.0
    %866 = vmatprep.subr.mxu0 0.0
    %867 = vmatpush1.msra.mxu0 0.0
    %868 = vmatprep.subr.mxu0 0.0
    %869 = vmatpush1.msra.mxu0 0.0
    %870 = vmatprep.subr.mxu0 0.0
    %871 = vmatpush1.msra.mxu0 0.0
    %872 = vmatprep.subr.mxu0 0.0
    %873 = vmatpush1.msra.mxu0 0.0
    %874 = vmatprep.subr.mxu0 0.0
    %875 = vmatpush1.msra.mxu0 0.0
    %876 = vmatprep.subr.mxu0 0.0
    %877 = vmatpush1.msra.mxu0 0.0
    %878 = vmatprep.subr.mxu0 0.0
    %879 = vmatpush1.msra.mxu0 0.0
    %880 = vmatprep.subr.mxu0 0.0
    %881 = vmatpush1.msra.mxu0 0.0
    %882 = vmatprep.subr.mxu0 0.0
    %883 = vmatpush1.msra.mxu0 0.0
    %884 = vmatprep.subr.mxu0 0.0
    %885 = vmatpush1.msra.mxu0 0.0
    %886 = vmatprep.subr.mxu0 0.0
    %887 = vmatpush1.msra.mxu0 0.0
    %888 = vmatprep.subr.mxu0 0.0
    %889 = vmatpush1.msra.mxu0 0.0
    %890 = vmatprep.subr.mxu0 0.0
    %891 = vmatpush1.msra.mxu0 0.0
    %892 = vmatprep.subr.mxu0 0.0
    %893 = vmatpush1.msra.mxu0 0.0
    %894 = vmatprep.subr.mxu0 0.0
    %895 = vmatpush1.msra.mxu0 0.0
    %896 = vmatprep.subr.mxu0 0.0
    %897 = vmatpush1.msra.mxu0 0.0
    %898 = vmatprep.subr.mxu0 0.0
    %899 = vmatpush1.msra.mxu0 0.0
    %900 = vmatprep.subr.mxu0 0.0
    %901 = vmatpush1.msra.mxu0 0.0
    %902 = vmatprep.subr.mxu0 0.0
    %903 = vmatpush1.msra.mxu0 0.0
    %904 = vmatprep.subr.mxu0 0.0
    %905 = vmatpush1.msra.mxu0 0.0
    %906 = vmatprep.subr.mxu0 0.0
    %907 = vmatpush1.msra.mxu0 0.0
    %908 = vmatprep.subr.mxu0 0.0
    %909 = vmatpush1.msra.mxu0 0.0
    %910 = vmatprep.subr.mxu0 0.0
    %911 = vmatpush1.msra.mxu0 0.0
    %912 = vmatprep.subr.mxu0 0.0
    %913 = vmatpush1.msra.mxu0 0.0
    %914 = vmatprep.mubr.f32.mxu0 0.0
    %915 = vmatmul.mubr.f32.gmra.mrb[0].mxu0 %v848
    %v916 = vpop.f32.mrb[0].mxu0
    %v917 = vadd.f32 0.0, %v916
    %v918 = vpop.f32.mrb[0].mxu0
    %919 = vdwg.mxu0
    %v921 = vrot.slane %v917, 4
    %v923 = vadd.f32 %v626, %v921
    %v924 = vxor.u32 %v923, 2147483648
    %v925 = vmul.f32 %v924, 1.442695
    %v926 = vpow.pop %v925
    %v927 = vadd.f32 %v926, 1.0
    %v928 = vrcp.pop %v927
    %v929 = vmul.f32 1.0, %v928
    %v930 = vmul.f32 %v929, 2.0
    %v931 = vsub.f32 %v930, 1.0
    %v933 = vrot.slane %v837, 6
    %v935 = vmul.f32 %v929, %v933
    %937 = vrot.lane.b32.xlu0 %v931, 64
    %v938 = vpop.permute.xlu0 %937
    %v940 = vmul.f32 %v929, %v938
    %942 = vrot.lane.b32.xlu0 %v940, 32
    %v943 = vpop.permute.xlu0 %942
    %v945 = vadd.f32 %v935, %v943
    %v946 = vtanh.pop %v945
    %948 = vrot.lane.b32.xlu0 %v946, 64
    %v949 = vpop.permute.xlu0 %948
    %v951 = vmul.f32 %v929, %v949
    %v953 = vrot.slane %v951, 4
    %954 = vrot.lane.b32.xlu0 %v953, 32
    %v955 = vpop.permute.xlu0 %954
    %v956 = vsel %vm63, %v955, 0
    %958 = vmatprep.subr.mxu0 0.0
    %959 = vmatpush1.msra.mxu0 %v634
    %960 = vmatprep.subr.mxu0 0.0
    %961 = vmatpush1.msra.mxu0 %v635
    %962 = vmatprep.subr.mxu0 0.0
    %963 = vmatpush1.msra.mxu0 %v636
    %964 = vmatprep.subr.mxu0 0.0
    %965 = vmatpush1.msra.mxu0 %v637
    %966 = vmatprep.subr.mxu0 0.0
    %967 = vmatpush1.msra.mxu0 0.0
    %968 = vmatprep.subr.mxu0 0.0
    %969 = vmatpush1.msra.mxu0 0.0
    %970 = vmatprep.subr.mxu0 0.0
    %971 = vmatpush1.msra.mxu0 0.0
    %972 = vmatprep.subr.mxu0 0.0
    %973 = vmatpush1.msra.mxu0 0.0
    %974 = vmatprep.subr.mxu0 0.0
    %975 = vmatpush1.msra.mxu0 0.0
    %976 = vmatprep.subr.mxu0 0.0
    %977 = vmatpush1.msra.mxu0 0.0
    %978 = vmatprep.subr.mxu0 0.0
    %979 = vmatpush1.msra.mxu0 0.0
    %980 = vmatprep.subr.mxu0 0.0
    %981 = vmatpush1.msra.mxu0 0.0
    %982 = vmatprep.subr.mxu0 0.0
    %983 = vmatpush1.msra.mxu0 0.0
    %984 = vmatprep.subr.mxu0 0.0
    %985 = vmatpush1.msra.mxu0 0.0
    %986 = vmatprep.subr.mxu0 0.0
    %987 = vmatpush1.msra.mxu0 0.0
    %988 = vmatprep.subr.mxu0 0.0
    %989 = vmatpush1.msra.mxu0 0.0
    %990 = vmatprep.subr.mxu0 0.0
    %991 = vmatpush1.msra.mxu0 0.0
    %992 = vmatprep.subr.mxu0 0.0
    %993 = vmatpush1.msra.mxu0 0.0
    %994 = vmatprep.subr.mxu0 0.0
    %995 = vmatpush1.msra.mxu0 0.0
    %996 = vmatprep.subr.mxu0 0.0
    %997 = vmatpush1.msra.mxu0 0.0
    %998 = vmatprep.subr.mxu0 0.0
    %999 = vmatpush1.msra.mxu0 0.0
    %1000 = vmatprep.subr.mxu0 0.0
    %1001 = vmatpush1.msra.mxu0 0.0
    %1002 = vmatprep.subr.mxu0 0.0
    %1003 = vmatpush1.msra.mxu0 0.0
    %1004 = vmatprep.subr.mxu0 0.0
    %1005 = vmatpush1.msra.mxu0 0.0
    %1006 = vmatprep.subr.mxu0 0.0
    %1007 = vmatpush1.msra.mxu0 0.0
    %1008 = vmatprep.subr.mxu0 0.0
    %1009 = vmatpush1.msra.mxu0 0.0
    %1010 = vmatprep.subr.mxu0 0.0
    %1011 = vmatpush1.msra.mxu0 0.0
    %1012 = vmatprep.subr.mxu0 0.0
    %1013 = vmatpush1.msra.mxu0 0.0
    %1014 = vmatprep.subr.mxu0 0.0
    %1015 = vmatpush1.msra.mxu0 0.0
    %1016 = vmatprep.subr.mxu0 0.0
    %1017 = vmatpush1.msra.mxu0 0.0
    %1018 = vmatprep.subr.mxu0 0.0
    %1019 = vmatpush1.msra.mxu0 0.0
    %1020 = vmatprep.subr.mxu0 0.0
    %1021 = vmatpush1.msra.mxu0 0.0
    %1022 = vmatprep.mubr.f32.mxu0 0.0
    %1023 = vmatmul.mubr.f32.gmra.mrb[0].mxu0 %v956
    %v1024 = vpop.f32.mrb[0].mxu0
    %v1025 = vadd.f32 0.0, %v1024
    %v1026 = vpop.f32.mrb[0].mxu0
    %1027 = vdwg.mxu0
    %v1029 = vrot.slane %v1025, 2
    %v1031 = vadd.f32 %v626, %v1029
    %v1032 = vxor.u32 %v1031, 2147483648
    %v1033 = vmul.f32 %v1032, 1.442695
    %v1034 = vpow.pop %v1033
    %v1035 = vadd.f32 %v1034, 1.0
    %v1036 = vrcp.pop %v1035
    %v1037 = vmul.f32 1.0, %v1036
    %v1038 = vmul.f32 %v1037, 2.0
    %v1039 = vsub.f32 %v1038, 1.0
    %v1041 = vrot.slane %v945, 6
    %v1043 = vmul.f32 %v1037, %v1041
    %1045 = vrot.lane.b32.xlu0 %v1039, 64
    %v1046 = vpop.permute.xlu0 %1045
    %v1048 = vmul.f32 %v1037, %v1046
    %1050 = vrot.lane.b32.xlu0 %v1048, 32
    %v1051 = vpop.permute.xlu0 %1050
    %v1053 = vadd.f32 %v1043, %v1051
    %v1054 = vtanh.pop %v1053
    %1056 = vrot.lane.b32.xlu0 %v1054, 64
    %v1057 = vpop.permute.xlu0 %1056
    %v1059 = vmul.f32 %v1037, %v1057
    %v1061 = vrot.slane %v1059, 6
    %1062 = vrot.lane.b32.xlu0 %v1061, 32
    %v1063 = vpop.permute.xlu0 %1062
    %v1064 = vsel %vm63, %v1063, 0
    %1066 = vmatprep.subr.mxu0 0.0
    %1067 = vmatpush1.msra.mxu0 %v634
    %1068 = vmatprep.subr.mxu0 0.0
    %1069 = vmatpush1.msra.mxu0 %v635
    %1070 = vmatprep.subr.mxu0 0.0
    %1071 = vmatpush1.msra.mxu0 %v636
    %1072 = vmatprep.subr.mxu0 0.0
    %1073 = vmatpush1.msra.mxu0 %v637
    %1074 = vmatprep.subr.mxu0 0.0
    %1075 = vmatpush1.msra.mxu0 0.0
    %1076 = vmatprep.subr.mxu0 0.0
    %1077 = vmatpush1.msra.mxu0 0.0
    %1078 = vmatprep.subr.mxu0 0.0
    %1079 = vmatpush1.msra.mxu0 0.0
    %1080 = vmatprep.subr.mxu0 0.0
    %1081 = vmatpush1.msra.mxu0 0.0
    %1082 = vmatprep.subr.mxu0 0.0
    %1083 = vmatpush1.msra.mxu0 0.0
    %1084 = vmatprep.subr.mxu0 0.0
    %1085 = vmatpush1.msra.mxu0 0.0
    %1086 = vmatprep.subr.mxu0 0.0
    %1087 = vmatpush1.msra.mxu0 0.0
    %1088 = vmatprep.subr.mxu0 0.0
    %1089 = vmatpush1.msra.mxu0 0.0
    %1090 = vmatprep.subr.mxu0 0.0
    %1091 = vmatpush1.msra.mxu0 0.0
    %1092 = vmatprep.subr.mxu0 0.0
    %1093 = vmatpush1.msra.mxu0 0.0
    %1094 = vmatprep.subr.mxu0 0.0
    %1095 = vmatpush1.msra.mxu0 0.0
    %1096 = vmatprep.subr.mxu0 0.0
    %1097 = vmatpush1.msra.mxu0 0.0
    %1098 = vmatprep.subr.mxu0 0.0
    %1099 = vmatpush1.msra.mxu0 0.0
    %1100 = vmatprep.subr.mxu0 0.0
    %1101 = vmatpush1.msra.mxu0 0.0
    %1102 = vmatprep.subr.mxu0 0.0
    %1103 = vmatpush1.msra.mxu0 0.0
    %1104 = vmatprep.subr.mxu0 0.0
    %1105 = vmatpush1.msra.mxu0 0.0
    %1106 = vmatprep.subr.mxu0 0.0
    %1107 = vmatpush1.msra.mxu0 0.0
    %1108 = vmatprep.subr.mxu0 0.0
    %1109 = vmatpush1.msra.mxu0 0.0
    %1110 = vmatprep.subr.mxu0 0.0
    %1111 = vmatpush1.msra.mxu0 0.0
    %1112 = vmatprep.subr.mxu0 0.0
    %1113 = vmatpush1.msra.mxu0 0.0
    %1114 = vmatprep.subr.mxu0 0.0
    %1115 = vmatpush1.msra.mxu0 0.0
    %1116 = vmatprep.subr.mxu0 0.0
    %1117 = vmatpush1.msra.mxu0 0.0
    %1118 = vmatprep.subr.mxu0 0.0
    %1119 = vmatpush1.msra.mxu0 0.0
    %1120 = vmatprep.subr.mxu0 0.0
    %1121 = vmatpush1.msra.mxu0 0.0
    %1122 = vmatprep.subr.mxu0 0.0
    %1123 = vmatpush1.msra.mxu0 0.0
    %1124 = vmatprep.subr.mxu0 0.0
    %1125 = vmatpush1.msra.mxu0 0.0
    %1126 = vmatprep.subr.mxu0 0.0
    %1127 = vmatpush1.msra.mxu0 0.0
    %1128 = vmatprep.subr.mxu0 0.0
    %1129 = vmatpush1.msra.mxu0 0.0
    %1130 = vmatprep.mubr.f32.mxu0 0.0
    %1131 = vmatmul.mubr.f32.gmra.mrb[0].mxu0 %v1064
    %v1132 = vpop.f32.mrb[0].mxu0
    %v1133 = vadd.f32 0.0, %v1132
    %v1134 = vpop.f32.mrb[0].mxu0
    %1135 = vdwg.mxu0
    %v1136 = vadd.f32 %v631, %v1133
    %v1137 = vxor.u32 %v1136, 2147483648
    %v1138 = vmul.f32 %v1137, 1.442695
    %v1139 = vpow.pop %v1138
    %v1140 = vadd.f32 %v1139, 1.0
    %v1141 = vrcp.pop %v1140
    %v1142 = vmul.f32 1.0, %v1141
    %v1143 = vmul.f32 %v1142, 2.0
    %v1144 = vsub.f32 %v1143, 1.0
    %v1146 = vrot.slane %v1053, 6
    %v1148 = vmul.f32 %v1142, %v1146
    %1150 = vrot.lane.b32.xlu0 %v1144, 64
    %v1151 = vpop.permute.xlu0 %1150
    %v1153 = vmul.f32 %v1142, %v1151
    %1155 = vrot.lane.b32.xlu0 %v1153, 32
    %v1156 = vpop.permute.xlu0 %1155
    %v1158 = vadd.f32 %v1148, %v1156
    %v1159 = vtanh.pop %v1158
    %1161 = vrot.lane.b32.xlu0 %v1159, 64
    %v1162 = vpop.permute.xlu0 %1161
    %v1164 = vmul.f32 %v1142, %v1162
    %1166 = vrot.lane.b32.xlu0 %v1164, 32
    %v1167 = vpop.permute.xlu0 %1166
    %v1168 = vsel %vm63, %v1167, 0
    %1170 = vmatprep.subr.mxu0 0.0
    %1171 = vmatpush1.msra.mxu0 %v634
    %1172 = vmatprep.subr.mxu0 0.0
    %1173 = vmatpush1.msra.mxu0 %v635
    %1174 = vmatprep.subr.mxu0 0.0
    %1175 = vmatpush1.msra.mxu0 %v636
    %1176 = vmatprep.subr.mxu0 0.0
    %1177 = vmatpush1.msra.mxu0 %v637
    %1178 = vmatprep.subr.mxu0 0.0
    %1179 = vmatpush1.msra.mxu0 0.0
    %1180 = vmatprep.subr.mxu0 0.0
    %1181 = vmatpush1.msra.mxu0 0.0
    %1182 = vmatprep.subr.mxu0 0.0
    %1183 = vmatpush1.msra.mxu0 0.0
    %1184 = vmatprep.subr.mxu0 0.0
    %1185 = vmatpush1.msra.mxu0 0.0
    %1186 = vmatprep.subr.mxu0 0.0
    %1187 = vmatpush1.msra.mxu0 0.0
    %1188 = vmatprep.subr.mxu0 0.0
    %1189 = vmatpush1.msra.mxu0 0.0
    %1190 = vmatprep.subr.mxu0 0.0
    %1191 = vmatpush1.msra.mxu0 0.0
    %1192 = vmatprep.subr.mxu0 0.0
    %1193 = vmatpush1.msra.mxu0 0.0
    %1194 = vmatprep.subr.mxu0 0.0
    %1195 = vmatpush1.msra.mxu0 0.0
    %1196 = vmatprep.subr.mxu0 0.0
    %1197 = vmatpush1.msra.mxu0 0.0
    %1198 = vmatprep.subr.mxu0 0.0
    %1199 = vmatpush1.msra.mxu0 0.0
    %1200 = vmatprep.subr.mxu0 0.0
    %1201 = vmatpush1.msra.mxu0 0.0
    %1202 = vmatprep.subr.mxu0 0.0
    %1203 = vmatpush1.msra.mxu0 0.0
    %1204 = vmatprep.subr.mxu0 0.0
    %1205 = vmatpush1.msra.mxu0 0.0
    %1206 = vmatprep.subr.mxu0 0.0
    %1207 = vmatpush1.msra.mxu0 0.0
    %1208 = vmatprep.subr.mxu0 0.0
    %1209 = vmatpush1.msra.mxu0 0.0
    %1210 = vmatprep.subr.mxu0 0.0
    %1211 = vmatpush1.msra.mxu0 0.0
    %1212 = vmatprep.subr.mxu0 0.0
    %1213 = vmatpush1.msra.mxu0 0.0
    %1214 = vmatprep.subr.mxu0 0.0
    %1215 = vmatpush1.msra.mxu0 0.0
    %1216 = vmatprep.subr.mxu0 0.0
    %1217 = vmatpush1.msra.mxu0 0.0
    %1218 = vmatprep.subr.mxu0 0.0
    %1219 = vmatpush1.msra.mxu0 0.0
    %1220 = vmatprep.subr.mxu0 0.0
    %1221 = vmatpush1.msra.mxu0 0.0
    %1222 = vmatprep.subr.mxu0 0.0
    %1223 = vmatpush1.msra.mxu0 0.0
    %1224 = vmatprep.subr.mxu0 0.0
    %1225 = vmatpush1.msra.mxu0 0.0
    %1226 = vmatprep.subr.mxu0 0.0
    %1227 = vmatpush1.msra.mxu0 0.0
    %1228 = vmatprep.subr.mxu0 0.0
    %1229 = vmatpush1.msra.mxu0 0.0
    %1230 = vmatprep.subr.mxu0 0.0
    %1231 = vmatpush1.msra.mxu0 0.0
    %1232 = vmatprep.subr.mxu0 0.0
    %1233 = vmatpush1.msra.mxu0 0.0
    %1234 = vmatprep.mubr.f32.mxu0 0.0
    %1235 = vmatmul.mubr.f32.gmra.mrb[0].mxu0 %v1168
    %v1236 = vpop.f32.mrb[0].mxu0
    %v1237 = vadd.f32 0.0, %v1236
    %v1238 = vpop.f32.mrb[0].mxu0
    %1239 = vdwg.mxu0
    %v1241 = vrot.slane %v1237, 6
    %v1243 = vadd.f32 %v631, %v1241
    %v1244 = vxor.u32 %v1243, 2147483648
    %v1245 = vmul.f32 %v1244, 1.442695
    %v1246 = vpow.pop %v1245
    %v1247 = vadd.f32 %v1246, 1.0
    %v1248 = vrcp.pop %v1247
    %v1249 = vmul.f32 1.0, %v1248
    %v1250 = vmul.f32 %v1249, 2.0
    %v1251 = vsub.f32 %v1250, 1.0
    %v1253 = vrot.slane %v1158, 6
    %v1255 = vmul.f32 %v1249, %v1253
    %1257 = vrot.lane.b32.xlu0 %v1251, 64
    %v1258 = vpop.permute.xlu0 %1257
    %v1260 = vmul.f32 %v1249, %v1258
    %1262 = vrot.lane.b32.xlu0 %v1260, 32
    %v1263 = vpop.permute.xlu0 %1262
    %v1265 = vadd.f32 %v1255, %v1263
    %v1266 = vtanh.pop %v1265
    %1268 = vrot.lane.b32.xlu0 %v1266, 64
    %v1269 = vpop.permute.xlu0 %1268
    %v1271 = vmul.f32 %v1249, %v1269
    %v1273 = vrot.slane %v1271, 2
    %1274 = vrot.lane.b32.xlu0 %v1273, 32
    %v1275 = vpop.permute.xlu0 %1274
    %v1276 = vsel %vm63, %v1275, 0
    %1278 = vmatprep.subr.mxu0 0.0
    %1279 = vmatpush1.msra.mxu0 %v634
    %1280 = vmatprep.subr.mxu0 0.0
    %1281 = vmatpush1.msra.mxu0 %v635
    %1282 = vmatprep.subr.mxu0 0.0
    %1283 = vmatpush1.msra.mxu0 %v636
    %1284 = vmatprep.subr.mxu0 0.0
    %1285 = vmatpush1.msra.mxu0 %v637
    %1286 = vmatprep.subr.mxu0 0.0
    %1287 = vmatpush1.msra.mxu0 0.0
    %1288 = vmatprep.subr.mxu0 0.0
    %1289 = vmatpush1.msra.mxu0 0.0
    %1290 = vmatprep.subr.mxu0 0.0
    %1291 = vmatpush1.msra.mxu0 0.0
    %1292 = vmatprep.subr.mxu0 0.0
    %1293 = vmatpush1.msra.mxu0 0.0
    %1294 = vmatprep.subr.mxu0 0.0
    %1295 = vmatpush1.msra.mxu0 0.0
    %1296 = vmatprep.subr.mxu0 0.0
    %1297 = vmatpush1.msra.mxu0 0.0
    %1298 = vmatprep.subr.mxu0 0.0
    %1299 = vmatpush1.msra.mxu0 0.0
    %1300 = vmatprep.subr.mxu0 0.0
    %1301 = vmatpush1.msra.mxu0 0.0
    %1302 = vmatprep.subr.mxu0 0.0
    %1303 = vmatpush1.msra.mxu0 0.0
    %1304 = vmatprep.subr.mxu0 0.0
    %1305 = vmatpush1.msra.mxu0 0.0
    %1306 = vmatprep.subr.mxu0 0.0
    %1307 = vmatpush1.msra.mxu0 0.0
    %1308 = vmatprep.subr.mxu0 0.0
    %1309 = vmatpush1.msra.mxu0 0.0
    %1310 = vmatprep.subr.mxu0 0.0
    %1311 = vmatpush1.msra.mxu0 0.0
    %1312 = vmatprep.subr.mxu0 0.0
    %1313 = vmatpush1.msra.mxu0 0.0
    %1314 = vmatprep.subr.mxu0 0.0
    %1315 = vmatpush1.msra.mxu0 0.0
    %1316 = vmatprep.subr.mxu0 0.0
    %1317 = vmatpush1.msra.mxu0 0.0
    %1318 = vmatprep.subr.mxu0 0.0
    %1319 = vmatpush1.msra.mxu0 0.0
    %1320 = vmatprep.subr.mxu0 0.0
    %1321 = vmatpush1.msra.mxu0 0.0
    %1322 = vmatprep.subr.mxu0 0.0
    %1323 = vmatpush1.msra.mxu0 0.0
    %1324 = vmatprep.subr.mxu0 0.0
    %1325 = vmatpush1.msra.mxu0 0.0
    %1326 = vmatprep.subr.mxu0 0.0
    %1327 = vmatpush1.msra.mxu0 0.0
    %1328 = vmatprep.subr.mxu0 0.0
    %1329 = vmatpush1.msra.mxu0 0.0
    %1330 = vmatprep.subr.mxu0 0.0
    %1331 = vmatpush1.msra.mxu0 0.0
    %1332 = vmatprep.subr.mxu0 0.0
    %1333 = vmatpush1.msra.mxu0 0.0
    %1334 = vmatprep.subr.mxu0 0.0
    %1335 = vmatpush1.msra.mxu0 0.0
    %1336 = vmatprep.subr.mxu0 0.0
    %1337 = vmatpush1.msra.mxu0 0.0
    %1338 = vmatprep.subr.mxu0 0.0
    %1339 = vmatpush1.msra.mxu0 0.0
    %1340 = vmatprep.subr.mxu0 0.0
    %1341 = vmatpush1.msra.mxu0 0.0
    %1342 = vmatprep.mubr.f32.mxu0 0.0
    %1343 = vmatmul.mubr.f32.gmra.mrb[0].mxu0 %v1276
    %v1344 = vpop.f32.mrb[0].mxu0
    %v1345 = vadd.f32 0.0, %v1344
    %v1346 = vpop.f32.mrb[0].mxu0
    %1347 = vdwg.mxu0
    %v1349 = vrot.slane %v1345, 4
    %v1351 = vadd.f32 %v631, %v1349
    %v1352 = vxor.u32 %v1351, 2147483648
    %v1353 = vmul.f32 %v1352, 1.442695
    %v1354 = vpow.pop %v1353
    %v1355 = vadd.f32 %v1354, 1.0
    %v1356 = vrcp.pop %v1355
    %v1357 = vmul.f32 1.0, %v1356
    %v1358 = vmul.f32 %v1357, 2.0
    %v1359 = vsub.f32 %v1358, 1.0
    %v1361 = vrot.slane %v1265, 6
    %v1363 = vmul.f32 %v1357, %v1361
    %1365 = vrot.lane.b32.xlu0 %v1359, 64
    %v1366 = vpop.permute.xlu0 %1365
    %v1368 = vmul.f32 %v1357, %v1366
    %1370 = vrot.lane.b32.xlu0 %v1368, 32
    %v1371 = vpop.permute.xlu0 %1370
    %v1373 = vadd.f32 %v1363, %v1371
    %v1374 = vtanh.pop %v1373
    %1376 = vrot.lane.b32.xlu0 %v1374, 64
    %v1377 = vpop.permute.xlu0 %1376
    %v1379 = vmul.f32 %v1357, %v1377
    %v1380 = vld [vmem:[#allocation2 + $0x60] sm:$0xff]
    %v1381 = vld [vmem:[#allocation2 + $0x68] sm:$0xff]
    %v1382 = vld [vmem:[#allocation2 + $0x70] sm:$0xff]
    %v1383 = vld [vmem:[#allocation2 + $0x78] sm:$0xff]
    %v1384 = vld [vmem:[%s2 + $0x2] sm:$0x1]
    %v1385 = vlaneseq
    %v1386 = vshrl.u32 %v1385, 7
    %v1387 = vsub.s32 0, %v1386
    %v1388 = vrot.slane %v1384, %v1387
    %v1390 = vrot.slane %v1379, 4
    %1391 = vrot.lane.b32.xlu0 %v1390, 32
    %v1392 = vpop.permute.xlu0 %1391
    %v1393 = vsel %vm63, %v1392, 0
    %1395 = vmatprep.subr.mxu0 0.0
    %1396 = vmatpush1.msra.mxu0 %v1380
    %1397 = vmatprep.subr.mxu0 0.0
    %1398 = vmatpush1.msra.mxu0 %v1381
    %1399 = vmatprep.subr.mxu0 0.0
    %1400 = vmatpush1.msra.mxu0 %v1382
    %1401 = vmatprep.subr.mxu0 0.0
    %1402 = vmatpush1.msra.mxu0 %v1383
    %1403 = vmatprep.subr.mxu0 0.0
    %1404 = vmatpush1.msra.mxu0 0.0
    %1405 = vmatprep.subr.mxu0 0.0
    %1406 = vmatpush1.msra.mxu0 0.0
    %1407 = vmatprep.subr.mxu0 0.0
    %1408 = vmatpush1.msra.mxu0 0.0
    %1409 = vmatprep.subr.mxu0 0.0
    %1410 = vmatpush1.msra.mxu0 0.0
    %1411 = vmatprep.subr.mxu0 0.0
    %1412 = vmatpush1.msra.mxu0 0.0
    %1413 = vmatprep.subr.mxu0 0.0
    %1414 = vmatpush1.msra.mxu0 0.0
    %1415 = vmatprep.subr.mxu0 0.0
    %1416 = vmatpush1.msra.mxu0 0.0
    %1417 = vmatprep.subr.mxu0 0.0
    %1418 = vmatpush1.msra.mxu0 0.0
    %1419 = vmatprep.subr.mxu0 0.0
    %1420 = vmatpush1.msra.mxu0 0.0
    %1421 = vmatprep.subr.mxu0 0.0
    %1422 = vmatpush1.msra.mxu0 0.0
    %1423 = vmatprep.subr.mxu0 0.0
    %1424 = vmatpush1.msra.mxu0 0.0
    %1425 = vmatprep.subr.mxu0 0.0
    %1426 = vmatpush1.msra.mxu0 0.0
    %1427 = vmatprep.subr.mxu0 0.0
    %1428 = vmatpush1.msra.mxu0 0.0
    %1429 = vmatprep.subr.mxu0 0.0
    %1430 = vmatpush1.msra.mxu0 0.0
    %1431 = vmatprep.subr.mxu0 0.0
    %1432 = vmatpush1.msra.mxu0 0.0
    %1433 = vmatprep.subr.mxu0 0.0
    %1434 = vmatpush1.msra.mxu0 0.0
    %1435 = vmatprep.subr.mxu0 0.0
    %1436 = vmatpush1.msra.mxu0 0.0
    %1437 = vmatprep.subr.mxu0 0.0
    %1438 = vmatpush1.msra.mxu0 0.0
    %1439 = vmatprep.subr.mxu0 0.0
    %1440 = vmatpush1.msra.mxu0 0.0
    %1441 = vmatprep.subr.mxu0 0.0
    %1442 = vmatpush1.msra.mxu0 0.0
    %1443 = vmatprep.subr.mxu0 0.0
    %1444 = vmatpush1.msra.mxu0 0.0
    %1445 = vmatprep.subr.mxu0 0.0
    %1446 = vmatpush1.msra.mxu0 0.0
    %1447 = vmatprep.subr.mxu0 0.0
    %1448 = vmatpush1.msra.mxu0 0.0
    %1449 = vmatprep.subr.mxu0 0.0
    %1450 = vmatpush1.msra.mxu0 0.0
    %1451 = vmatprep.subr.mxu0 0.0
    %1452 = vmatpush1.msra.mxu0 0.0
    %1453 = vmatprep.subr.mxu0 0.0
    %1454 = vmatpush1.msra.mxu0 0.0
    %1455 = vmatprep.subr.mxu0 0.0
    %1456 = vmatpush1.msra.mxu0 0.0
    %1457 = vmatprep.subr.mxu0 0.0
    %1458 = vmatpush1.msra.mxu0 0.0
    %1459 = vmatprep.mubr.f32.mxu0 0.0
    %1460 = vmatmul.mubr.f32.gmra.mrb[0].mxu0 %v1393
    %v1461 = vpop.f32.mrb[0].mxu0
    %v1462 = vadd.f32 %v1388, %v1461
    %v1463 = vpop.f32.mrb[0].mxu0
    %1464 = vdwg.mxu0
    %1465 = vst [vmem:[#allocation5] sm:$0x3] %v1462
    // Predicated region
    $region18: #{cnn_lstm_forward.1} parent=1 // pred_check
      _
    $region19: #{cnn_lstm_forward.1} parent=1 // pred_check_branch
      %1467 = sbr.rel (0) target = $region21
    $region20: #{cnn_lstm_forward.1} parent=1 // pred_region
      %s1469 = ssub.s32 32, 32
      %1470 = vsyncadd [#allocation4], %s1469
      %s1472 = sshll.u32 [#allocation5], 4
      %s1473 = int_to_ptr.vmem [resolvable:$true] %s1472
      %1475 = dma.vmem_to_hbm [thread:$0]  %s1473, 32, %s3, [#allocation4]
    $region21: #{cnn_lstm_forward.1} parent=1 // pred_fallthru
      _
    // Predicated region
    $region22: #{cnn_lstm_forward.1} parent=1 // pred_check
      _
    $region23: #{cnn_lstm_forward.1} parent=1 // pred_check_branch
      %1477 = sbr.rel (0) target = $region25
    $region24: #{cnn_lstm_forward.1} parent=1 // pred_region
      %1478 = dma.done [#allocation4], 32
    $region25: #{cnn_lstm_forward.1} parent=1 // pred_fallthru
      _
    %1479 = vsyncpa [#allocation3], 1
    %1480 = vsyncpa [#allocation4], 1

</llo_original>
